<compile_context>
chip_gen: v6e
topology: v6e:2x2x1
jax: 0.10.0
libtpu: 0.0.40
codegen_flags: <defaults>
</compile_context>

<pallas_src>
import functools

import jax
import jax.numpy as jnp
from jax.experimental import pallas as pl
from jax.experimental.pallas import tpu as pltpu


# ----------------------------------------------------------------------------
# In-kernel helpers
# ----------------------------------------------------------------------------
def _layer_norm(x, g, b, eps):
    # Matches the module's custom LayerNorm: unbiased std (ddof=1), /(std+eps).
    mean = jnp.mean(x, axis=-1, keepdims=True)
    xc = x - mean
    var = jnp.sum(xc * xc, axis=-1, keepdims=True) / (x.shape[-1] - 1)
    inv = pl.reciprocal(jnp.sqrt(var) + eps, approx=True)   # EUP slot
    return g * (xc * inv) + b


def _split_heads(x2d, n_head, dh, dtype):
    # (S, D) -> (H, S, dh) as register-level lane slices + leading-axis stack:
    # no masked lane stores, no VMEM scratch round-trip.
    return jnp.stack([x2d[:, h * dh:(h + 1) * dh] for h in range(n_head)],
                     axis=0).astype(dtype)


# ----------------------------------------------------------------------------
# Fused MHA kernel: one grid step = one (batch, query-tile).
# ----------------------------------------------------------------------------
def _mha_kernel(q_in_ref, k_in_ref, v_in_ref,
                wq_ref, bq_ref, wk_ref, bk_ref, wv_ref, bv_ref,
                wo_ref, bo_ref, g_ref, beta_ref,
                o_ref,
                k_hm_scr, v_hm_scr,
                *, n_head, dh, skv_len, tkv, n_kv, eps):
    i = pl.program_id(1)
    scale = 1.0 / (dh ** 0.5)

    # ---- K/V projections: once per batch (grid axis 1 is "arbitrary"),
    #      stored head-major in bf16 persistent VMEM scratch. ----
    @pl.when(i == 0)
    def _():
        xk = k_in_ref[0]                                   # (Skv_pad, D) bf16
        xv = v_in_ref[0]
        kf = jnp.dot(xk, wk_ref[...], preferred_element_type=jnp.float32) + bk_ref[...]
        vf = jnp.dot(xv, wv_ref[...], preferred_element_type=jnp.float32) + bv_ref[...]
        k_hm_scr[...] = _split_heads(kf, n_head, dh, jnp.bfloat16)
        v_hm_scr[...] = _split_heads(vf, n_head, dh, jnp.bfloat16)

    # ---- Q projection for this query tile ----
    x_res = q_in_ref[0]                                    # (tq, D) f32 residual
    x = x_res.astype(jnp.bfloat16)
    qf = jnp.dot(x, wq_ref[...], preferred_element_type=jnp.float32) + bq_ref[...]
    qf = qf * scale            # fold 1/sqrt(dh) into Q (cheaper than scaling scores)
    q_hm = _split_heads(qf, n_head, dh, jnp.bfloat16)      # (H, tq, dh)
    tq = x_res.shape[0]

    # ---- online-softmax attention over KV chunks (bounds live score memory) ----
    m = jnp.full((n_head, tq, 1), -jnp.inf, jnp.float32)
    l = jnp.zeros((n_head, tq, 1), jnp.float32)
    acc = jnp.zeros((n_head, tq, dh), jnp.float32)
    # TODO(synk): for very long Skv, switch this static unroll to a fori_loop or
    #             an extra "arbitrary" grid axis (and stream K/V chunks).
    for c in range(n_kv):
        start = c * tkv
        k_c = k_hm_scr[:, start:start + tkv, :]            # (H, tkv, dh) bf16
        v_c = v_hm_scr[:, start:start + tkv, :]
        s = jnp.einsum("hqd,hkd->hqk", q_hm, k_c,
                       preferred_element_type=jnp.float32)  # (H, tq, tkv) f32
        # TODO(synk): user attention mask (mask==0 -> -1e9) would be applied here.
        if start + tkv > skv_len:  # only the last chunk can hold padded keys
            kv_idx = jax.lax.broadcasted_iota(jnp.int32, s.shape, 2)
            s = jnp.where(kv_idx < (skv_len - start), s, -1e30)
        m_new = jnp.maximum(m, jnp.max(s, axis=-1, keepdims=True))
        alpha = jnp.exp(m - m_new)
        p = jnp.exp(s - m_new)
        l = alpha * l + jnp.sum(p, axis=-1, keepdims=True)
        acc = alpha * acc + jnp.einsum("hqk,hkd->hqd", p.astype(jnp.bfloat16), v_c,
                                       preferred_element_type=jnp.float32)
        m = m_new

    # Deferred softmax normalization: scale the (H, tq, dh) context, not the
    # (H, tq, Skv) probabilities.  TODO(synk): dropout on p_attn skipped (eval).
    ctx = acc * pl.reciprocal(l, approx=True)

    # ---- merge heads (register-level lane concat) + output projection ----
    attn = jnp.concatenate([ctx[h] for h in range(n_head)], axis=-1)   # (tq, D) f32
    y = jnp.dot(attn.astype(jnp.bfloat16), wo_ref[...],
                preferred_element_type=jnp.float32) + bo_ref[...]
    y = y + x_res                                                      # residual f32
    # TODO(synk): with d_model < 128 this store is a masked vst; pad/fold d_model
    #             to a multiple of 128 lanes (and consider bf16 output) in prod.
    o_ref[0] = _layer_norm(y, g_ref[...], beta_ref[...], eps)


# ----------------------------------------------------------------------------
# pallas_call wrapper
# ----------------------------------------------------------------------------
def _vmem_limit_bytes():
    # ~3/4 of per-core physical VMEM: ~48 MiB on v7x, ~96 MiB on v5e/v6e.
    try:
        cap = int(pltpu.get_tpu_info().vmem_capacity_bytes)
    except Exception:
        return 48 * 1024 * 1024
    return max(32 * 1024 * 1024, min(cap * 3 // 4, 96 * 1024 * 1024))


def multi_headed_attention(query, key, value, params, n_head, eps=1e-6,
                           kv_chunk=512):
    B, Sq, D = query.shape
    _, Skv, _ = key.shape
    assert value.shape == key.shape
    assert D % n_head == 0
    dh = D // n_head

    wq, bq, wk, bk, wv, bv, wo, bo, g, beta = params
    # Matmul weights stored/DMA'd as bf16 (MXU-native), f32 accumulation.
    wq_b, wk_b, wv_b, wo_b = (w.astype(jnp.bfloat16) for w in (wq, wk, wv, wo))

    vmem_limit = _vmem_limit_bytes()

    # Query tiling: fixed 128 (256 when VMEM-rich, e.g. v6e), pad the remainder.
    if Sq <= 128:
        tq = Sq
    elif Sq >= 256 and vmem_limit >= 80 * 1024 * 1024:
        tq = 256
    else:
        tq = 128
    n_qt = pl.cdiv(Sq, tq)
    sq_pad = n_qt * tq
    if sq_pad != Sq:
        query = jnp.pad(query, ((0, 0), (0, sq_pad - Sq), (0, 0)))

    # KV chunking (flash-style online softmax) + bf16 K/V DMA.
    if Skv <= kv_chunk:
        tkv = ((Skv + 7) // 8) * 8
    else:
        tkv = kv_chunk
    n_kv = pl.cdiv(Skv, tkv)
    skv_pad = n_kv * tkv
    key_b = key.astype(jnp.bfloat16)
    value_b = value.astype(jnp.bfloat16)
    if skv_pad != Skv:
        key_b = jnp.pad(key_b, ((0, 0), (0, skv_pad - Skv), (0, 0)))
        value_b = jnp.pad(value_b, ((0, 0), (0, skv_pad - Skv), (0, 0)))

    def fullblock(shape):
        return pl.BlockSpec(shape, lambda b, i: (0,) * len(shape))

    grid_spec = pltpu.PrefetchScalarGridSpec(
        num_scalar_prefetch=0,
        grid=(B, n_qt),
        in_specs=[
            pl.BlockSpec((1, tq, D), lambda b, i: (b, i, 0)),        # query (f32)
            pl.BlockSpec((1, skv_pad, D), lambda b, i: (b, 0, 0)),   # key   (bf16)
            pl.BlockSpec((1, skv_pad, D), lambda b, i: (b, 0, 0)),   # value (bf16)
            fullblock((D, D)), fullblock((1, D)),                    # Wq, bq
            fullblock((D, D)), fullblock((1, D)),                    # Wk, bk
            fullblock((D, D)), fullblock((1, D)),                    # Wv, bv
            fullblock((D, D)), fullblock((1, D)),                    # Wo, bo
            fullblock((1, D)), fullblock((1, D)),                    # gamma, beta
        ],
        out_specs=pl.BlockSpec((1, tq, D), lambda b, i: (b, i, 0)),
        scratch_shapes=[
            pltpu.VMEM((n_head, skv_pad, dh), jnp.bfloat16),   # K head-major (per batch)
            pltpu.VMEM((n_head, skv_pad, dh), jnp.bfloat16),   # V head-major (per batch)
        ],
    )

    kernel = functools.partial(_mha_kernel, n_head=n_head, dh=dh, skv_len=Skv,
                               tkv=tkv, n_kv=n_kv, eps=eps)
    out = pl.pallas_call(
        kernel,
        out_shape=jax.ShapeDtypeStruct((B, sq_pad, D), jnp.float32),
        grid_spec=grid_spec,
        compiler_params=pltpu.CompilerParams(
            # Axis 1 must be sequential: the KV scratch is filled at i == 0 and
            # reused by later query tiles of the same batch.
            dimension_semantics=("parallel", "arbitrary"),
            vmem_limit_bytes=vmem_limit,
        ),
    )(query, key_b, value_b, wq_b, bq, wk_b, bk, wv_b, bv, wo_b, bo, g, beta)
    if sq_pad != Sq:
        out = out[:, :Sq, :]
    return out


# ----------------------------------------------------------------------------
# Deterministic parameter init (shapes match nn.Linear(d_model, d_model) x4
# plus LayerNorm); weights stored as (in, out) so y = x @ W + b.
# ----------------------------------------------------------------------------
def _init_linear(rng, din, dout):
    k1, k2 = jax.random.split(rng)
    bound = 1.0 / jnp.sqrt(jnp.float32(din))
    w = jax.random.uniform(k1, (din, dout), jnp.float32, -bound, bound)
    b = jax.random.uniform(k2, (1, dout), jnp.float32, -bound, bound)
    return w, b


def _init_mha(rng, d_model):
    ks = jax.random.split(rng, 4)
    wq, bq = _init_linear(ks[0], d_model, d_model)
    wk, bk = _init_linear(ks[1], d_model, d_model)
    wv, bv = _init_linear(ks[2], d_model, d_model)
    wo, bo = _init_linear(ks[3], d_model, d_model)
    g = jnp.ones((1, d_model), jnp.float32)
    beta = jnp.zeros((1, d_model), jnp.float32)
    return (wq, bq, wk, bk, wv, bv, wo, bo, g, beta)


# ----------------------------------------------------------------------------
# Pure-JAX reference (mirrors the PyTorch forward).  mxu_bf16=True emulates the
# kernel's bf16-operand / f32-accumulate matmuls for a tight correctness check.
# ----------------------------------------------------------------------------
def _ref_layer_norm(x, g, b, eps=1e-6):
    mean = x.mean(-1, keepdims=True)
    std = jnp.sqrt(((x - mean) ** 2).sum(-1, keepdims=True) / (x.shape[-1] - 1))
    return g * (x - mean) / (std + eps) + b


def _ref_mha(query, key, value, params, n_head, eps=1e-6, mxu_bf16=False):
    wq, bq, wk, bk, wv, bv, wo, bo, g, beta = params
    cast = (lambda a: a.astype(jnp.bfloat16)) if mxu_bf16 else (lambda a: a)
    B, Sq, D = query.shape
    d = D // n_head

    def proj(x, w, b):
        return jnp.dot(cast(x), cast(w), preferred_element_type=jnp.float32) + b

    q = proj(query, wq, bq).reshape(B, Sq, n_head, d).transpose(0, 2, 1, 3)
    k = proj(key, wk, bk).reshape(B, -1, n_head, d).transpose(0, 2, 1, 3)
    v = proj(value, wv, bv).reshape(B, -1, n_head, d).transpose(0, 2, 1, 3)

    scores = jnp.einsum("bhqd,bhkd->bhqk", cast(q), cast(k),
                        preferred_element_type=jnp.float32) / jnp.sqrt(jnp.float32(d))
    p = jax.nn.softmax(scores, axis=-1)
    ctx = jnp.einsum("bhqk,bhkd->bhqd", cast(p), cast(v),
                     preferred_element_type=jnp.float32)
    attn = ctx.transpose(0, 2, 1, 3).reshape(B, Sq, D)
    y = jnp.dot(cast(attn), cast(wo), preferred_element_type=jnp.float32) + bo + query
    return _ref_layer_norm(y, g, beta, eps)


# ----------------------------------------------------------------------------
if __name__ == "__main__":
    rng = jax.random.PRNGKey(0)

    def run_case(B, Sq, Skv, d_model, n_head, kv_chunk, seed_offset):
        ks = jax.random.split(jax.random.fold_in(rng, seed_offset), 4)
        query = jax.random.normal(ks[0], (B, Sq, d_model), jnp.float32)
        key = jax.random.normal(ks[1], (B, Skv, d_model), jnp.float32)
        value = jax.random.normal(ks[2], (B, Skv, d_model), jnp.float32)
        params = _init_mha(ks[3], d_model)

        out = multi_headed_attention(query, key, value, params, n_head,
                                     kv_chunk=kv_chunk)
        out = jax.block_until_ready(out)
        assert out.shape == (B, Sq, d_model)

        # Tight check vs a reference with the same bf16-matmul precision.
        ref_bf16 = _ref_mha(query, key, value, params, n_head, mxu_bf16=True)
        assert jnp.allclose(out, ref_bf16, atol=2e-2, rtol=2e-2), \
            "mismatch vs bf16-precision reference"
        # Sanity check vs the exact-f32 PyTorch-faithful math.
        ref_f32 = _ref_mha(query, key, value, params, n_head, mxu_bf16=False)
        assert jnp.allclose(out, ref_f32, atol=1e-1, rtol=1e-1), \
            "mismatch vs f32 reference"

    # Small canonical shape (single query tile, single KV chunk + padded tail).
    run_case(B=2, Sq=8, Skv=10, d_model=32, n_head=4, kv_chunk=512, seed_offset=0)
    # Exercise multi-tile / multi-chunk paths: query padding, per-batch KV hoist
    # reused across query tiles, online softmax over KV chunks, KV tail masking.
    run_case(B=2, Sq=160, Skv=40, d_model=32, n_head=4, kv_chunk=16, seed_offset=1)

    print("KERNEL_OK")
</pallas_src>

<mosaic_0001>
module attributes {stable_mosaic.version = 11 : i64} {
  func.func @_mha_kernel(%arg0: i32, %arg1: i32, %arg2: memref<1x8x32xf32, #tpu.memory_space<vmem>>, %arg3: memref<1x16x32xbf16, #tpu.memory_space<vmem>>, %arg4: memref<1x16x32xbf16, #tpu.memory_space<vmem>>, %arg5: memref<32x32xbf16, #tpu.memory_space<vmem>>, %arg6: memref<1x32xf32, #tpu.memory_space<vmem>>, %arg7: memref<32x32xbf16, #tpu.memory_space<vmem>>, %arg8: memref<1x32xf32, #tpu.memory_space<vmem>>, %arg9: memref<32x32xbf16, #tpu.memory_space<vmem>>, %arg10: memref<1x32xf32, #tpu.memory_space<vmem>>, %arg11: memref<32x32xbf16, #tpu.memory_space<vmem>>, %arg12: memref<1x32xf32, #tpu.memory_space<vmem>>, %arg13: memref<1x32xf32, #tpu.memory_space<vmem>>, %arg14: memref<1x32xf32, #tpu.memory_space<vmem>>, %arg15: memref<1x8x32xf32, #tpu.memory_space<vmem>>, %arg16: memref<4x16x8xbf16, #tpu.memory_space<vmem>>, %arg17: memref<4x16x8xbf16, #tpu.memory_space<vmem>>) attributes {dimension_semantics = [#tpu.dimension_semantics<parallel>, #tpu.dimension_semantics<arbitrary>], iteration_bounds = array<i64: 2, 1>, scalar_prefetch = 0 : i64, scratch_operands = 2 : i64, tpu.core_type = #tpu.core_type<tc>, window_params = [{transform_indices = @transform_0, window_bounds = array<i64: 1, 8, 32>}, {transform_indices = @transform_1, window_bounds = array<i64: 1, 16, 32>}, {transform_indices = @transform_2, window_bounds = array<i64: 1, 16, 32>}, {pipeline_mode = #tpu.pipeline_mode<synchronous>, transform_indices = @transform_3, window_bounds = array<i64: 32, 32>}, {pipeline_mode = #tpu.pipeline_mode<synchronous>, transform_indices = @transform_4, window_bounds = array<i64: 1, 32>}, {pipeline_mode = #tpu.pipeline_mode<synchronous>, transform_indices = @transform_5, window_bounds = array<i64: 32, 32>}, {pipeline_mode = #tpu.pipeline_mode<synchronous>, transform_indices = @transform_6, window_bounds = array<i64: 1, 32>}, {pipeline_mode = #tpu.pipeline_mode<synchronous>, transform_indices = @transform_7, window_bounds = array<i64: 32, 32>}, {pipeline_mode = #tpu.pipeline_mode<synchronous>, transform_indices = @transform_8, window_bounds = array<i64: 1, 32>}, {pipeline_mode = #tpu.pipeline_mode<synchronous>, transform_indices = @transform_9, window_bounds = array<i64: 32, 32>}, {pipeline_mode = #tpu.pipeline_mode<synchronous>, transform_indices = @transform_10, window_bounds = array<i64: 1, 32>}, {pipeline_mode = #tpu.pipeline_mode<synchronous>, transform_indices = @transform_11, window_bounds = array<i64: 1, 32>}, {pipeline_mode = #tpu.pipeline_mode<synchronous>, transform_indices = @transform_12, window_bounds = array<i64: 1, 32>}, {transform_indices = @transform_13, window_bounds = array<i64: 1, 8, 32>}]} {
    %c0_i32 = arith.constant 0 : i32
    %0 = arith.cmpi eq, %arg1, %c0_i32 : i32
    %1 = arith.extui %0 : i1 to i32
    %c0_i32_0 = arith.constant 0 : i32
    %2 = arith.cmpi ne, %1, %c0_i32_0 : i32
    scf.if %2 {
      %c0_39 = arith.constant 0 : index
      %c0_40 = arith.constant 0 : index
      %c0_41 = arith.constant 0 : index
      %96 = vector.load %arg3[%c0_39, %c0_40, %c0_41] : memref<1x16x32xbf16, #tpu.memory_space<vmem>>, vector<1x16x32xbf16>
      %97 = vector.shape_cast %96 : vector<1x16x32xbf16> to vector<16x32xbf16>
      %c0_42 = arith.constant 0 : index
      %c0_43 = arith.constant 0 : index
      %c0_44 = arith.constant 0 : index
      %98 = vector.load %arg4[%c0_42, %c0_43, %c0_44] : memref<1x16x32xbf16, #tpu.memory_space<vmem>>, vector<1x16x32xbf16>
      %99 = vector.shape_cast %98 : vector<1x16x32xbf16> to vector<16x32xbf16>
      %c0_45 = arith.constant 0 : index
      %c0_46 = arith.constant 0 : index
      %100 = vector.load %arg7[%c0_45, %c0_46] : memref<32x32xbf16, #tpu.memory_space<vmem>>, vector<32x32xbf16>
      %cst_47 = arith.constant dense<0.000000e+00> : vector<16x32xf32>
      %101 = tpu.matmul %97, %100, %cst_47 {dimension_numbers = #tpu.dot_dimension_numbers<[1], [0], [0], [1], [0, 0, 1, 1], [], []>} : vector<16x32xbf16>, vector<32x32xbf16>, vector<16x32xf32> -> vector<16x32xf32>
      %c0_48 = arith.constant 0 : index
      %c0_49 = arith.constant 0 : index
      %102 = vector.load %arg8[%c0_48, %c0_49] : memref<1x32xf32, #tpu.memory_space<vmem>>, vector<1x32xf32>
      %103 = vector.broadcast %102 : vector<1x32xf32> to vector<16x32xf32>
      %104 = arith.addf %101, %103 : vector<16x32xf32>
      %c0_50 = arith.constant 0 : index
      %c0_51 = arith.constant 0 : index
      %105 = vector.load %arg9[%c0_50, %c0_51] : memref<32x32xbf16, #tpu.memory_space<vmem>>, vector<32x32xbf16>
      %cst_52 = arith.constant dense<0.000000e+00> : vector<16x32xf32>
      %106 = tpu.matmul %99, %105, %cst_52 {dimension_numbers = #tpu.dot_dimension_numbers<[1], [0], [0], [1], [0, 0, 1, 1], [], []>} : vector<16x32xbf16>, vector<32x32xbf16>, vector<16x32xf32> -> vector<16x32xf32>
      %c0_53 = arith.constant 0 : index
      %c0_54 = arith.constant 0 : index
      %107 = vector.load %arg10[%c0_53, %c0_54] : memref<1x32xf32, #tpu.memory_space<vmem>>, vector<1x32xf32>
      %108 = vector.broadcast %107 : vector<1x32xf32> to vector<16x32xf32>
      %109 = arith.addf %106, %108 : vector<16x32xf32>
      %110 = vector.extract_strided_slice %104 {offsets = [0, 0], sizes = [16, 8], strides = [1, 1]} : vector<16x32xf32> to vector<16x8xf32>
      %111 = vector.extract_strided_slice %104 {offsets = [0, 8], sizes = [16, 8], strides = [1, 1]} : vector<16x32xf32> to vector<16x8xf32>
      %112 = vector.extract_strided_slice %104 {offsets = [0, 16], sizes = [16, 8], strides = [1, 1]} : vector<16x32xf32> to vector<16x8xf32>
      %113 = vector.extract_strided_slice %104 {offsets = [0, 24], sizes = [16, 8], strides = [1, 1]} : vector<16x32xf32> to vector<16x8xf32>
      %114 = vector.shape_cast %110 : vector<16x8xf32> to vector<1x16x8xf32>
      %115 = vector.shape_cast %111 : vector<16x8xf32> to vector<1x16x8xf32>
      %116 = vector.shape_cast %112 : vector<16x8xf32> to vector<1x16x8xf32>
      %117 = vector.shape_cast %113 : vector<16x8xf32> to vector<1x16x8xf32>
      %118 = tpu.concatenate %114, %115, %116, %117 in 0 : vector<1x16x8xf32>, vector<1x16x8xf32>, vector<1x16x8xf32>, vector<1x16x8xf32> -> vector<4x16x8xf32>
      %119 = arith.truncf %118 : vector<4x16x8xf32> to vector<4x16x8xbf16>
      %c0_55 = arith.constant 0 : index
      %c0_56 = arith.constant 0 : index
      %c0_57 = arith.constant 0 : index
      %120 = vector.load %arg16[%c0_55, %c0_56, %c0_57] : memref<4x16x8xbf16, #tpu.memory_space<vmem>>, vector<4x16x8xbf16>
      tpu.vector_store %arg16[%c0_55, %c0_56, %c0_57], %119 {strides = array<i32>} : memref<4x16x8xbf16, #tpu.memory_space<vmem>>, vector<4x16x8xbf16>,
      %121 = vector.extract_strided_slice %109 {offsets = [0, 0], sizes = [16, 8], strides = [1, 1]} : vector<16x32xf32> to vector<16x8xf32>
      %122 = vector.extract_strided_slice %109 {offsets = [0, 8], sizes = [16, 8], strides = [1, 1]} : vector<16x32xf32> to vector<16x8xf32>
      %123 = vector.extract_strided_slice %109 {offsets = [0, 16], sizes = [16, 8], strides = [1, 1]} : vector<16x32xf32> to vector<16x8xf32>
      %124 = vector.extract_strided_slice %109 {offsets = [0, 24], sizes = [16, 8], strides = [1, 1]} : vector<16x32xf32> to vector<16x8xf32>
      %125 = vector.shape_cast %121 : vector<16x8xf32> to vector<1x16x8xf32>
      %126 = vector.shape_cast %122 : vector<16x8xf32> to vector<1x16x8xf32>
      %127 = vector.shape_cast %123 : vector<16x8xf32> to vector<1x16x8xf32>
      %128 = vector.shape_cast %124 : vector<16x8xf32> to vector<1x16x8xf32>
      %129 = tpu.concatenate %125, %126, %127, %128 in 0 : vector<1x16x8xf32>, vector<1x16x8xf32>, vector<1x16x8xf32>, vector<1x16x8xf32> -> vector<4x16x8xf32>
      %130 = arith.truncf %129 : vector<4x16x8xf32> to vector<4x16x8xbf16>
      %c0_58 = arith.constant 0 : index
      %c0_59 = arith.constant 0 : index
      %c0_60 = arith.constant 0 : index
      %131 = vector.load %arg17[%c0_58, %c0_59, %c0_60] : memref<4x16x8xbf16, #tpu.memory_space<vmem>>, vector<4x16x8xbf16>
      tpu.vector_store %arg17[%c0_58, %c0_59, %c0_60], %130 {strides = array<i32>} : memref<4x16x8xbf16, #tpu.memory_space<vmem>>, vector<4x16x8xbf16>,
    } else {
    }
    %c0 = arith.constant 0 : index
    %c0_1 = arith.constant 0 : index
    %c0_2 = arith.constant 0 : index
    %3 = vector.load %arg2[%c0, %c0_1, %c0_2] : memref<1x8x32xf32, #tpu.memory_space<vmem>>, vector<1x8x32xf32>
    %4 = vector.shape_cast %3 : vector<1x8x32xf32> to vector<8x32xf32>
    %5 = arith.truncf %4 : vector<8x32xf32> to vector<8x32xbf16>
    %c0_3 = arith.constant 0 : index
    %c0_4 = arith.constant 0 : index
    %6 = vector.load %arg5[%c0_3, %c0_4] : memref<32x32xbf16, #tpu.memory_space<vmem>>, vector<32x32xbf16>
    %cst = arith.constant dense<0.000000e+00> : vector<8x32xf32>
    %7 = tpu.matmul %5, %6, %cst {dimension_numbers = #tpu.dot_dimension_numbers<[1], [0], [0], [1], [0, 0, 1, 1], [], []>} : vector<8x32xbf16>, vector<32x32xbf16>, vector<8x32xf32> -> vector<8x32xf32>
    %c0_5 = arith.constant 0 : index
    %c0_6 = arith.constant 0 : index
    %8 = vector.load %arg6[%c0_5, %c0_6] : memref<1x32xf32, #tpu.memory_space<vmem>>, vector<1x32xf32>
    %9 = vector.broadcast %8 : vector<1x32xf32> to vector<8x32xf32>
    %10 = arith.addf %7, %9 : vector<8x32xf32>
    %cst_7 = arith.constant 0.353553385 : f32
    %11 = vector.broadcast %cst_7 : f32 to vector<8x32xf32>
    %12 = arith.mulf %10, %11 : vector<8x32xf32>
    %13 = vector.extract_strided_slice %12 {offsets = [0, 0], sizes = [8, 8], strides = [1, 1]} : vector<8x32xf32> to vector<8x8xf32>
    %14 = vector.extract_strided_slice %12 {offsets = [0, 8], sizes = [8, 8], strides = [1, 1]} : vector<8x32xf32> to vector<8x8xf32>
    %15 = vector.extract_strided_slice %12 {offsets = [0, 16], sizes = [8, 8], strides = [1, 1]} : vector<8x32xf32> to vector<8x8xf32>
    %16 = vector.extract_strided_slice %12 {offsets = [0, 24], sizes = [8, 8], strides = [1, 1]} : vector<8x32xf32> to vector<8x8xf32>
    %17 = vector.shape_cast %13 : vector<8x8xf32> to vector<1x8x8xf32>
    %18 = vector.shape_cast %14 : vector<8x8xf32> to vector<1x8x8xf32>
    %19 = vector.shape_cast %15 : vector<8x8xf32> to vector<1x8x8xf32>
    %20 = vector.shape_cast %16 : vector<8x8xf32> to vector<1x8x8xf32>
    %21 = tpu.concatenate %17, %18, %19, %20 in 0 : vector<1x8x8xf32>, vector<1x8x8xf32>, vector<1x8x8xf32>, vector<1x8x8xf32> -> vector<4x8x8xf32>
    %22 = arith.truncf %21 : vector<4x8x8xf32> to vector<4x8x8xbf16>
    %cst_8 = arith.constant 0xFF800000 : f32
    %23 = vector.broadcast %cst_8 : f32 to vector<4x8x1xf32>
    %cst_9 = arith.constant 0.000000e+00 : f32
    %24 = vector.broadcast %cst_9 : f32 to vector<4x8x1xf32>
    %cst_10 = arith.constant 0.000000e+00 : f32
    %25 = vector.broadcast %cst_10 : f32 to vector<4x8x8xf32>
    %c0_11 = arith.constant 0 : index
    %c0_12 = arith.constant 0 : index
    %c0_13 = arith.constant 0 : index
    %26 = vector.load %arg16[%c0_11, %c0_12, %c0_13] : memref<4x16x8xbf16, #tpu.memory_space<vmem>>, vector<4x16x8xbf16>
    %c0_14 = arith.constant 0 : index
    %c0_15 = arith.constant 0 : index
    %c0_16 = arith.constant 0 : index
    %27 = vector.load %arg17[%c0_14, %c0_15, %c0_16] : memref<4x16x8xbf16, #tpu.memory_space<vmem>>, vector<4x16x8xbf16>
    "tpu.trace_start"() <{level = 10 : i32, message = "hqd,hkd->hqk"}> : () -> ()
    %cst_17 = arith.constant dense<0.000000e+00> : vector<4x8x16xf32>
    %28 = tpu.matmul %22, %26, %cst_17 {dimension_numbers = #tpu.dot_dimension_numbers<[2], [2], [1], [1], [0, 0, 0, 1, 1, 1], [0], [0]>} : vector<4x8x8xbf16>, vector<4x16x8xbf16>, vector<4x8x16xf32> -> vector<4x8x16xf32>
    "tpu.trace_stop"() : () -> ()
    %29 = tpu.iota {dimensions = array<i32: 2>} : vector<4x8x16xi32>
    %c10_i32 = arith.constant 10 : i32
    %30 = vector.broadcast %c10_i32 : i32 to vector<4x8x16xi32>
    %31 = arith.cmpi slt, %29, %30 : vector<4x8x16xi32>
    %cst_18 = arith.constant -1.000000e+30 : f32
    %32 = vector.broadcast %cst_18 : f32 to vector<4x8x16xf32>
    %33 = arith.select %31, %28, %32 : vector<4x8x16xi1>, vector<4x8x16xf32>
    %cst_19 = arith.constant dense<0xFF800000> : vector<4x8xf32>
    %34 = vector.multi_reduction <maximumf>, %33, %cst_19 [2] : vector<4x8x16xf32> to vector<4x8xf32>
    %35 = vector.shape_cast %34 : vector<4x8xf32> to vector<4x8x1xf32>
    %36 = arith.maximumf %23, %35 : vector<4x8x1xf32>
    %37 = arith.subf %23, %36 : vector<4x8x1xf32>
    %38 = math.exp %37 : vector<4x8x1xf32>
    %39 = vector.broadcast %36 : vector<4x8x1xf32> to vector<4x8x16xf32>
    %40 = arith.subf %33, %39 : vector<4x8x16xf32>
    %41 = math.exp %40 : vector<4x8x16xf32>
    %42 = arith.mulf %38, %24 : vector<4x8x1xf32>
    %cst_20 = arith.constant dense<0.000000e+00> : vector<4x8xf32>
    %43 = vector.multi_reduction <add>, %41, %cst_20 [2] : vector<4x8x16xf32> to vector<4x8xf32>
    %44 = vector.shape_cast %43 : vector<4x8xf32> to vector<4x8x1xf32>
    %45 = arith.addf %42, %44 : vector<4x8x1xf32>
    %46 = vector.broadcast %38 : vector<4x8x1xf32> to vector<4x8x8xf32>
    %47 = arith.mulf %46, %25 : vector<4x8x8xf32>
    %48 = arith.truncf %41 : vector<4x8x16xf32> to vector<4x8x16xbf16>
    "tpu.trace_start"() <{level = 10 : i32, message = "hqk,hkd->hqd"}> : () -> ()
    %cst_21 = arith.constant dense<0.000000e+00> : vector<4x8x8xf32>
    %49 = tpu.matmul %48, %27, %cst_21 {dimension_numbers = #tpu.dot_dimension_numbers<[2], [1], [1], [2], [0, 0, 0, 1, 1, 2], [0], [0]>} : vector<4x8x16xbf16>, vector<4x16x8xbf16>, vector<4x8x8xf32> -> vector<4x8x8xf32>
    "tpu.trace_stop"() : () -> ()
    %50 = arith.addf %47, %49 : vector<4x8x8xf32>
    %51 = tpu.reciprocal %45 {approx = true} : vector<4x8x1xf32> -> vector<4x8x1xf32>
    %52 = vector.broadcast %51 : vector<4x8x1xf32> to vector<4x8x8xf32>
    %53 = arith.mulf %50, %52 : vector<4x8x8xf32>
    %54 = vector.extract_strided_slice %53 {offsets = [0, 0, 0], sizes = [1, 8, 8], strides = [1, 1, 1]} : vector<4x8x8xf32> to vector<1x8x8xf32>
    %55 = vector.shape_cast %54 : vector<1x8x8xf32> to vector<8x8xf32>
    %56 = vector.extract_strided_slice %53 {offsets = [1, 0, 0], sizes = [1, 8, 8], strides = [1, 1, 1]} : vector<4x8x8xf32> to vector<1x8x8xf32>
    %57 = vector.shape_cast %56 : vector<1x8x8xf32> to vector<8x8xf32>
    %58 = vector.extract_strided_slice %53 {offsets = [2, 0, 0], sizes = [1, 8, 8], strides = [1, 1, 1]} : vector<4x8x8xf32> to vector<1x8x8xf32>
    %59 = vector.shape_cast %58 : vector<1x8x8xf32> to vector<8x8xf32>
    %60 = vector.extract_strided_slice %53 {offsets = [3, 0, 0], sizes = [1, 8, 8], strides = [1, 1, 1]} : vector<4x8x8xf32> to vector<1x8x8xf32>
    %61 = vector.shape_cast %60 : vector<1x8x8xf32> to vector<8x8xf32>
    %62 = tpu.concatenate %55, %57, %59, %61 in 1 : vector<8x8xf32>, vector<8x8xf32>, vector<8x8xf32>, vector<8x8xf32> -> vector<8x32xf32>
    %63 = arith.truncf %62 : vector<8x32xf32> to vector<8x32xbf16>
    %c0_22 = arith.constant 0 : index
    %c0_23 = arith.constant 0 : index
    %64 = vector.load %arg11[%c0_22, %c0_23] : memref<32x32xbf16, #tpu.memory_space<vmem>>, vector<32x32xbf16>
    %cst_24 = arith.constant dense<0.000000e+00> : vector<8x32xf32>
    %65 = tpu.matmul %63, %64, %cst_24 {dimension_numbers = #tpu.dot_dimension_numbers<[1], [0], [0], [1], [0, 0, 1, 1], [], []>} : vector<8x32xbf16>, vector<32x32xbf16>, vector<8x32xf32> -> vector<8x32xf32>
    %c0_25 = arith.constant 0 : index
    %c0_26 = arith.constant 0 : index
    %66 = vector.load %arg12[%c0_25, %c0_26] : memref<1x32xf32, #tpu.memory_space<vmem>>, vector<1x32xf32>
    %67 = vector.broadcast %66 : vector<1x32xf32> to vector<8x32xf32>
    %68 = arith.addf %65, %67 : vector<8x32xf32>
    %69 = arith.addf %68, %4 : vector<8x32xf32>
    %c0_27 = arith.constant 0 : index
    %c0_28 = arith.constant 0 : index
    %70 = vector.load %arg13[%c0_27, %c0_28] : memref<1x32xf32, #tpu.memory_space<vmem>>, vector<1x32xf32>
    %c0_29 = arith.constant 0 : index
    %c0_30 = arith.constant 0 : index
    %71 = vector.load %arg14[%c0_29, %c0_30] : memref<1x32xf32, #tpu.memory_space<vmem>>, vector<1x32xf32>
    %cst_31 = arith.constant dense<0.000000e+00> : vector<8xf32>
    %72 = vector.multi_reduction <add>, %69, %cst_31 [1] : vector<8x32xf32> to vector<8xf32>
    %73 = vector.shape_cast %72 : vector<8xf32> to vector<8x1xf32>
    %cst_32 = arith.constant 3.200000e+01 : f32
    %74 = vector.broadcast %cst_32 : f32 to vector<8x1xf32>
    %75 = arith.divf %73, %74 : vector<8x1xf32>
    %76 = vector.broadcast %75 : vector<8x1xf32> to vector<8x32xf32>
    %77 = arith.subf %69, %76 : vector<8x32xf32>
    %78 = arith.mulf %77, %77 : vector<8x32xf32>
    %cst_33 = arith.constant dense<0.000000e+00> : vector<8xf32>
    %79 = vector.multi_reduction <add>, %78, %cst_33 [1] : vector<8x32xf32> to vector<8xf32>
    %80 = vector.shape_cast %79 : vector<8xf32> to vector<8x1xf32>
    %cst_34 = arith.constant 3.100000e+01 : f32
    %81 = vector.broadcast %cst_34 : f32 to vector<8x1xf32>
    %82 = arith.divf %80, %81 : vector<8x1xf32>
    %83 = math.sqrt %82 : vector<8x1xf32>
    %cst_35 = arith.constant 9.99999997E-7 : f32
    %84 = vector.broadcast %cst_35 : f32 to vector<8x1xf32>
    %85 = arith.addf %83, %84 : vector<8x1xf32>
    %86 = tpu.reciprocal %85 {approx = true} : vector<8x1xf32> -> vector<8x1xf32>
    %87 = vector.broadcast %86 : vector<8x1xf32> to vector<8x32xf32>
    %88 = arith.mulf %77, %87 : vector<8x32xf32>
    %89 = vector.broadcast %70 : vector<1x32xf32> to vector<8x32xf32>
    %90 = arith.mulf %89, %88 : vector<8x32xf32>
    %91 = vector.broadcast %71 : vector<1x32xf32> to vector<8x32xf32>
    %92 = arith.addf %90, %91 : vector<8x32xf32>
    %c0_36 = arith.constant 0 : index
    %c0_37 = arith.constant 0 : index
    %c0_38 = arith.constant 0 : index
    %93 = vector.load %arg15[%c0_36, %c0_37, %c0_38] : memref<1x8x32xf32, #tpu.memory_space<vmem>>, vector<1x8x32xf32>
    %94 = vector.shape_cast %93 : vector<1x8x32xf32> to vector<8x32xf32>
    %95 = vector.shape_cast %92 : vector<8x32xf32> to vector<1x8x32xf32>
    tpu.vector_store %arg15[%c0_36, %c0_37, %c0_38], %95 {strides = array<i32>} : memref<1x8x32xf32, #tpu.memory_space<vmem>>, vector<1x8x32xf32>,
    return
  }
  func.func @transform_0(%arg0: i32, %arg1: i32) -> (i32, i32, i32) {
    %c0_i32 = arith.constant 0 : i32
    %c0_i32_0 = arith.constant 0 : i32
    return %arg0, %arg1, %c0_i32 : i32, i32, i32
  }
  func.func @transform_1(%arg0: i32, %arg1: i32) -> (i32, i32, i32) {
    %c0_i32 = arith.constant 0 : i32
    %c0_i32_0 = arith.constant 0 : i32
    %c0_i32_1 = arith.constant 0 : i32
    return %arg0, %c0_i32, %c0_i32_0 : i32, i32, i32
  }
  func.func @transform_2(%arg0: i32, %arg1: i32) -> (i32, i32, i32) {
    %c0_i32 = arith.constant 0 : i32
    %c0_i32_0 = arith.constant 0 : i32
    %c0_i32_1 = arith.constant 0 : i32
    return %arg0, %c0_i32, %c0_i32_0 : i32, i32, i32
  }
  func.func @transform_3(%arg0: i32, %arg1: i32) -> (i32, i32) {
    %c0_i32 = arith.constant 0 : i32
    %c0_i32_0 = arith.constant 0 : i32
    %c0_i32_1 = arith.constant 0 : i32
    return %c0_i32, %c0_i32_0 : i32, i32
  }
  func.func @transform_4(%arg0: i32, %arg1: i32) -> (i32, i32) {
    %c0_i32 = arith.constant 0 : i32
    %c0_i32_0 = arith.constant 0 : i32
    %c0_i32_1 = arith.constant 0 : i32
    return %c0_i32, %c0_i32_0 : i32, i32
  }
  func.func @transform_5(%arg0: i32, %arg1: i32) -> (i32, i32) {
    %c0_i32 = arith.constant 0 : i32
    %c0_i32_0 = arith.constant 0 : i32
    %c0_i32_1 = arith.constant 0 : i32
    return %c0_i32, %c0_i32_0 : i32, i32
  }
  func.func @transform_6(%arg0: i32, %arg1: i32) -> (i32, i32) {
    %c0_i32 = arith.constant 0 : i32
    %c0_i32_0 = arith.constant 0 : i32
    %c0_i32_1 = arith.constant 0 : i32
    return %c0_i32, %c0_i32_0 : i32, i32
  }
  func.func @transform_7(%arg0: i32, %arg1: i32) -> (i32, i32) {
    %c0_i32 = arith.constant 0 : i32
    %c0_i32_0 = arith.constant 0 : i32
    %c0_i32_1 = arith.constant 0 : i32
    return %c0_i32, %c0_i32_0 : i32, i32
  }
  func.func @transform_8(%arg0: i32, %arg1: i32) -> (i32, i32) {
    %c0_i32 = arith.constant 0 : i32
    %c0_i32_0 = arith.constant 0 : i32
    %c0_i32_1 = arith.constant 0 : i32
    return %c0_i32, %c0_i32_0 : i32, i32
  }
  func.func @transform_9(%arg0: i32, %arg1: i32) -> (i32, i32) {
    %c0_i32 = arith.constant 0 : i32
    %c0_i32_0 = arith.constant 0 : i32
    %c0_i32_1 = arith.constant 0 : i32
    return %c0_i32, %c0_i32_0 : i32, i32
  }
  func.func @transform_10(%arg0: i32, %arg1: i32) -> (i32, i32) {
    %c0_i32 = arith.constant 0 : i32
    %c0_i32_0 = arith.constant 0 : i32
    %c0_i32_1 = arith.constant 0 : i32
    return %c0_i32, %c0_i32_0 : i32, i32
  }
  func.func @transform_11(%arg0: i32, %arg1: i32) -> (i32, i32) {
    %c0_i32 = arith.constant 0 : i32
    %c0_i32_0 = arith.constant 0 : i32
    %c0_i32_1 = arith.constant 0 : i32
    return %c0_i32, %c0_i32_0 : i32, i32
  }
  func.func @transform_12(%arg0: i32, %arg1: i32) -> (i32, i32) {
    %c0_i32 = arith.constant 0 : i32
    %c0_i32_0 = arith.constant 0 : i32
    %c0_i32_1 = arith.constant 0 : i32
    return %c0_i32, %c0_i32_0 : i32, i32
  }
  func.func @transform_13(%arg0: i32, %arg1: i32) -> (i32, i32, i32) {
    %c0_i32 = arith.constant 0 : i32
    %c0_i32_0 = arith.constant 0 : i32
    return %arg0, %arg1, %c0_i32 : i32, i32, i32
  }
}

</mosaic_0001>

<llo_original>
// kernel: tpu_custom_call.1
$region0: #{tpu_custom_call.1}
  #allocation0 [shape = 'u32[]', space=smem, size = 0x4, offset = 0x4, fixed_abs, tag = 'smem constant byte address 0x4 - core index']
  #allocation1 [shape = 'u32[144,128]{1,0:T(1,128)}', space=vmem, size = 0x12000, scoped, tag = 'internal scratch']
  #allocation2 [shape = 'bf16[4,16,8]{2,1,0:T(8,128)(2,1)}', space=vmem, size = 0x4000, scoped, tag = 'scratch operand']
  #allocation3 [shape = 'bf16[4,16,8]{2,1,0:T(8,128)(2,1)}', space=vmem, size = 0x4000, scoped, tag = 'scratch operand']
  %s0 = inlined_call_operand.hbm [shape: f32[2,8,32], index: 0, kind: input, shape index: {}]
  %s1 = inlined_call_operand.hbm [shape: bf16[2,16,32], index: 1, kind: input, shape index: {}]
  %s2 = inlined_call_operand.hbm [shape: bf16[2,16,32], index: 2, kind: input, shape index: {}]
  %s3 = inlined_call_operand.hbm [shape: bf16[32,32], index: 3, kind: input, shape index: {}]
  %s4 = inlined_call_operand.hbm [shape: f32[1,32], index: 4, kind: input, shape index: {}]
  %s5 = inlined_call_operand.hbm [shape: bf16[32,32], index: 5, kind: input, shape index: {}]
  %s6 = inlined_call_operand.hbm [shape: f32[1,32], index: 6, kind: input, shape index: {}]
  %s7 = inlined_call_operand.hbm [shape: bf16[32,32], index: 7, kind: input, shape index: {}]
  %s8 = inlined_call_operand.hbm [shape: f32[1,32], index: 8, kind: input, shape index: {}]
  %s9 = inlined_call_operand.vmem [shape: bf16[32,32], index: 9, kind: input, shape index: {}]
  %s10 = inlined_call_operand.vmem [shape: f32[1,32], index: 10, kind: input, shape index: {}]
  %s11 = inlined_call_operand.vmem [shape: f32[1,32], index: 11, kind: input, shape index: {}]
  %s12 = inlined_call_operand.vmem [shape: f32[1,32], index: 12, kind: input, shape index: {}]
  %s13 = inlined_call_operand.hbm [shape: f32[2,8,32], index: 13, kind: output, shape index: {}]
  %s14 = sld [smem:[#allocation0]]
  $region125: #{tpu_custom_call.1} parent=0
    _
  %s16 = ssub.s32 1, %s14
  %s17 = scalar_select 0, %s16, %s14
  $region1: #{tpu_custom_call.1} parent=0
    #allocation4 [shape = 'u8[8192]{0}', space=vmem, size = 0x2000, scoped, tag = 'input window, operand 0']
    #allocation5 [shape = 's32[2]{0}', space=sflag, size = 0x8, scoped, tag = 'scoped memory for tpu_custom_call.1']
    #allocation6 [shape = 's32[2]{0}', space=sflag, size = 0x8, scoped, tag = 'scoped memory for tpu_custom_call.1']
    #allocation7 [shape = 'u8[8192]{0}', space=vmem, size = 0x2000, scoped, tag = 'input window, operand 1']
    #allocation8 [shape = 's32[2]{0}', space=sflag, size = 0x8, scoped, tag = 'scoped memory for tpu_custom_call.1']
    #allocation9 [shape = 'u8[8192]{0}', space=vmem, size = 0x2000, scoped, tag = 'input window, operand 2']
    #allocation10 [shape = 'u8[8192]{0}', space=vmem, size = 0x2000, scoped, tag = 'input window, operand 3, single buffered']
    #allocation11 [shape = 's32[1]{0}', space=sflag, size = 0x4, scoped, tag = 'scoped memory for tpu_custom_call.1']
    #allocation12 [shape = 'u8[512]{0}', space=vmem, size = 0x400, scoped, tag = 'input window, operand 4, single buffered']
    #allocation13 [shape = 'u8[8192]{0}', space=vmem, size = 0x2000, scoped, tag = 'input window, operand 5, single buffered']
    #allocation14 [shape = 's32[1]{0}', space=sflag, size = 0x4, scoped, tag = 'scoped memory for tpu_custom_call.1']
    #allocation15 [shape = 'u8[512]{0}', space=vmem, size = 0x400, scoped, tag = 'input window, operand 6, single buffered']
    #allocation16 [shape = 'u8[8192]{0}', space=vmem, size = 0x2000, scoped, tag = 'input window, operand 7, single buffered']
    #allocation17 [shape = 's32[1]{0}', space=sflag, size = 0x4, scoped, tag = 'scoped memory for tpu_custom_call.1']
    #allocation18 [shape = 'u8[512]{0}', space=vmem, size = 0x400, scoped, tag = 'input window, operand 8, single buffered']
    #allocation19 [shape = 'u8[8192]{0}', space=vmem, size = 0x2000, scoped, tag = 'output window, operand 0']
    %18 = vsyncpa [#allocation5], 0
    %s19 = scalar_lea.sflag [#allocation5], 1
    %20 = vsyncpa %s19, 0
    %21 = vsyncpa [#allocation8], 0
    %s22 = scalar_lea.sflag [#allocation8], 1
    %23 = vsyncpa %s22, 0
    %24 = vsyncpa [#allocation11], 0
    %25 = vsyncpa [#allocation14], 0
    %26 = vsyncpa [#allocation17], 0
    %27 = vsyncpa [#allocation6], 0
    %s28 = scalar_lea.sflag [#allocation6], 1
    %29 = vsyncpa %s28, 0
    loop: start=0, step=1, limit=4
    $region2: #{tpu_custom_call.1} parent=1 // loop_pre_header
      _
    $region3: #{tpu_custom_call.1} parent=1 // loop_header
      %s31 = sphi 0, %s35
      %p32 = scmp.ge.s32.totalorder %s31, 4
      %s38 = sphi 0, %s50
      %s39 = sphi 0, %s46
      %s40 = sphi 0, %s38
      %s41 = sphi 0, %s39
      %s42 = sphi 0, %s40
      %s43 = sphi 0, %s41
      %s55 = sphi 0, %s57
      %s58 = sphi 0, %s55
      %s59 = sphi 0, %s58
      %s75 = sphi 0, %s59
      %s81 = sphi 0, %s83
      %s84 = sphi 0, %s81
      %s85 = sphi 0, %s84
      %s101 = sphi 0, %s85
      %s107 = sphi 0, %s109
      %s110 = sphi 0, %s107
      %s111 = sphi 0, %s110
      %s127 = sphi 0, %s111
      %s131 = sphi 0, %s131
      %s133 = sphi 0, %s131
      %s134 = sphi 0, %s133
      %s148 = sphi 0, %s134
      %s152 = sphi 0, %s152
      %s154 = sphi 0, %s152
      %s155 = sphi 0, %s154
      %s169 = sphi 0, %s155
      %s173 = sphi 0, %s173
      %s175 = sphi 0, %s173
      %s176 = sphi 0, %s175
      %s190 = sphi 0, %s176
      %s194 = sphi 0, %s194
      %s196 = sphi 0, %s194
      %s197 = sphi 0, %s196
      %s211 = sphi 0, %s197
      %s215 = sphi 0, %s215
      %s217 = sphi 0, %s215
      %s218 = sphi 0, %s217
      %s232 = sphi 0, %s218
      %s236 = sphi 0, %s236
      %s238 = sphi 0, %s236
      %s239 = sphi 0, %s238
      %s253 = sphi 0, %s239
      %s257 = sphi 0, %s257
      %s259 = sphi 0, %s257
      %s260 = sphi 0, %s259
      %s274 = sphi 0, %s260
      %s278 = sphi 0, %s278
      %s280 = sphi 0, %s278
      %s281 = sphi 0, %s280
      %s295 = sphi 0, %s281
      %s299 = sphi 0, %s299
      %s301 = sphi 0, %s299
      %s302 = sphi 0, %s301
      %s316 = sphi 0, %s302
      %s320 = sphi 0, %s320
      %s322 = sphi 0, %s320
      %s323 = sphi 0, %s322
      %s337 = sphi 0, %s323
      %s345 = sphi 0, %s347
      %s348 = sphi 0, %s345
      %s349 = sphi 0, %s348
      %s365 = sphi 0, %s349
    $region4: #{tpu_custom_call.1} parent=1 // loop_header_branch
      %34 = sbr.rel (%p32) target = $region8
    $region5: #{tpu_custom_call.1} parent=1 // loop_body
      %s36 = ssub.s32 %s31, 1
      %s37 = ssub.s32 %s31, 2
      %s44 = sadd.s32 1, %s39
      %p45 = scmp.ge.s32.totalorder %s44, 1
      %s46 = scalar_select %p45, 0, %s44
      %s47 = sadd.s32 1, %s38
      %s48 = scalar_select %p45, %s47, %s38
      %p49 = scmp.ge.s32.totalorder %s48, 2
      %s50 = scalar_select %p49, 0, %s48
      %s51 = ssub.s32 %s38, %s50
      %s52 = ssub.s32 %s39, %s46
      %s53 = sor.u32 %s51, %s52
      %p54 = scmp.eq.s32.totalorder %s53, 0
      %s56 = sadd.s32 %s55, 1
      %s57 = scalar_select %p54, %s55, %s56
      %p60 = pneg %p54
      %p61 = scmp.eq.s32.totalorder %s31, 1
      %p62 = por %p60, %p61
      %p63 = scmp.ne.s32.totalorder %s55, %s58
      %p64 = scmp.eq.s32.totalorder %s31, 0
      %p65 = por %p63, %p64
      %p66 = scmp.ne.s32.totalorder %s55, %s58
      %p67 = scmp.eq.s32.totalorder %s36, 1
      %p68 = por %p66, %p67
      %p69 = scmp.ne.s32.totalorder %s58, %s59
      %p70 = scmp.eq.s32.totalorder %s36, 0
      %p71 = por %p69, %p70
      %p72 = scmp.ne.s32.totalorder %s58, %s59
      %p73 = scmp.eq.s32.totalorder %s37, 1
      %p74 = por %p72, %p73
      %p76 = scmp.ne.s32.totalorder %s59, %s75
      %p77 = scmp.eq.s32.totalorder %s37, 0
      %p78 = por %p76, %p77
      %s79 = ssub.s32 %s38, %s50
      %p80 = scmp.eq.s32.totalorder %s79, 0
      %s82 = sadd.s32 %s81, 1
      %s83 = scalar_select %p80, %s81, %s82
      %p86 = pneg %p80
      %p87 = scmp.eq.s32.totalorder %s31, 1
      %p88 = por %p86, %p87
      %p89 = scmp.ne.s32.totalorder %s81, %s84
      %p90 = scmp.eq.s32.totalorder %s31, 0
      %p91 = por %p89, %p90
      %p92 = scmp.ne.s32.totalorder %s81, %s84
      %p93 = scmp.eq.s32.totalorder %s36, 1
      %p94 = por %p92, %p93
      %p95 = scmp.ne.s32.totalorder %s84, %s85
      %p96 = scmp.eq.s32.totalorder %s36, 0
      %p97 = por %p95, %p96
      %p98 = scmp.ne.s32.totalorder %s84, %s85
      %p99 = scmp.eq.s32.totalorder %s37, 1
      %p100 = por %p98, %p99
      %p102 = scmp.ne.s32.totalorder %s85, %s101
      %p103 = scmp.eq.s32.totalorder %s37, 0
      %p104 = por %p102, %p103
      %s105 = ssub.s32 %s38, %s50
      %p106 = scmp.eq.s32.totalorder %s105, 0
      %s108 = sadd.s32 %s107, 1
      %s109 = scalar_select %p106, %s107, %s108
      %p112 = pneg %p106
      %p113 = scmp.eq.s32.totalorder %s31, 1
      %p114 = por %p112, %p113
      %p115 = scmp.ne.s32.totalorder %s107, %s110
      %p116 = scmp.eq.s32.totalorder %s31, 0
      %p117 = por %p115, %p116
      %p118 = scmp.ne.s32.totalorder %s107, %s110
      %p119 = scmp.eq.s32.totalorder %s36, 1
      %p120 = por %p118, %p119
      %p121 = scmp.ne.s32.totalorder %s110, %s111
      %p122 = scmp.eq.s32.totalorder %s36, 0
      %p123 = por %p121, %p122
      %p124 = scmp.ne.s32.totalorder %s110, %s111
      %p125 = scmp.eq.s32.totalorder %s37, 1
      %p126 = por %p124, %p125
      %p128 = scmp.ne.s32.totalorder %s111, %s127
      %p129 = scmp.eq.s32.totalorder %s37, 0
      %p130 = por %p128, %p129
      %s132 = sadd.s32 %s131, 1
      %p135 = scmp.eq.s32.totalorder %s31, 1
      %p136 = scmp.ne.s32.totalorder %s131, %s133
      %p137 = scmp.eq.s32.totalorder %s31, 0
      %p138 = por %p136, %p137
      %p139 = scmp.ne.s32.totalorder %s131, %s133
      %p140 = scmp.eq.s32.totalorder %s36, 1
      %p141 = por %p139, %p140
      %p142 = scmp.ne.s32.totalorder %s133, %s134
      %p143 = scmp.eq.s32.totalorder %s36, 0
      %p144 = por %p142, %p143
      %p145 = scmp.ne.s32.totalorder %s133, %s134
      %p146 = scmp.eq.s32.totalorder %s37, 1
      %p147 = por %p145, %p146
      %p149 = scmp.ne.s32.totalorder %s134, %s148
      %p150 = scmp.eq.s32.totalorder %s37, 0
      %p151 = por %p149, %p150
      %s153 = sadd.s32 %s152, 1
      %p156 = scmp.eq.s32.totalorder %s31, 1
      %p157 = scmp.ne.s32.totalorder %s152, %s154
      %p158 = scmp.eq.s32.totalorder %s31, 0
      %p159 = por %p157, %p158
      %p160 = scmp.ne.s32.totalorder %s152, %s154
      %p161 = scmp.eq.s32.totalorder %s36, 1
      %p162 = por %p160, %p161
      %p163 = scmp.ne.s32.totalorder %s154, %s155
      %p164 = scmp.eq.s32.totalorder %s36, 0
      %p165 = por %p163, %p164
      %p166 = scmp.ne.s32.totalorder %s154, %s155
      %p167 = scmp.eq.s32.totalorder %s37, 1
      %p168 = por %p166, %p167
      %p170 = scmp.ne.s32.totalorder %s155, %s169
      %p171 = scmp.eq.s32.totalorder %s37, 0
      %p172 = por %p170, %p171
      %s174 = sadd.s32 %s173, 1
      %p177 = scmp.eq.s32.totalorder %s31, 1
      %p178 = scmp.ne.s32.totalorder %s173, %s175
      %p179 = scmp.eq.s32.totalorder %s31, 0
      %p180 = por %p178, %p179
      %p181 = scmp.ne.s32.totalorder %s173, %s175
      %p182 = scmp.eq.s32.totalorder %s36, 1
      %p183 = por %p181, %p182
      %p184 = scmp.ne.s32.totalorder %s175, %s176
      %p185 = scmp.eq.s32.totalorder %s36, 0
      %p186 = por %p184, %p185
      %p187 = scmp.ne.s32.totalorder %s175, %s176
      %p188 = scmp.eq.s32.totalorder %s37, 1
      %p189 = por %p187, %p188
      %p191 = scmp.ne.s32.totalorder %s176, %s190
      %p192 = scmp.eq.s32.totalorder %s37, 0
      %p193 = por %p191, %p192
      %s195 = sadd.s32 %s194, 1
      %p198 = scmp.eq.s32.totalorder %s31, 1
      %p199 = scmp.ne.s32.totalorder %s194, %s196
      %p200 = scmp.eq.s32.totalorder %s31, 0
      %p201 = por %p199, %p200
      %p202 = scmp.ne.s32.totalorder %s194, %s196
      %p203 = scmp.eq.s32.totalorder %s36, 1
      %p204 = por %p202, %p203
      %p205 = scmp.ne.s32.totalorder %s196, %s197
      %p206 = scmp.eq.s32.totalorder %s36, 0
      %p207 = por %p205, %p206
      %p208 = scmp.ne.s32.totalorder %s196, %s197
      %p209 = scmp.eq.s32.totalorder %s37, 1
      %p210 = por %p208, %p209
      %p212 = scmp.ne.s32.totalorder %s197, %s211
      %p213 = scmp.eq.s32.totalorder %s37, 0
      %p214 = por %p212, %p213
      %s216 = sadd.s32 %s215, 1
      %p219 = scmp.eq.s32.totalorder %s31, 1
      %p220 = scmp.ne.s32.totalorder %s215, %s217
      %p221 = scmp.eq.s32.totalorder %s31, 0
      %p222 = por %p220, %p221
      %p223 = scmp.ne.s32.totalorder %s215, %s217
      %p224 = scmp.eq.s32.totalorder %s36, 1
      %p225 = por %p223, %p224
      %p226 = scmp.ne.s32.totalorder %s217, %s218
      %p227 = scmp.eq.s32.totalorder %s36, 0
      %p228 = por %p226, %p227
      %p229 = scmp.ne.s32.totalorder %s217, %s218
      %p230 = scmp.eq.s32.totalorder %s37, 1
      %p231 = por %p229, %p230
      %p233 = scmp.ne.s32.totalorder %s218, %s232
      %p234 = scmp.eq.s32.totalorder %s37, 0
      %p235 = por %p233, %p234
      %s237 = sadd.s32 %s236, 1
      %p240 = scmp.eq.s32.totalorder %s31, 1
      %p241 = scmp.ne.s32.totalorder %s236, %s238
      %p242 = scmp.eq.s32.totalorder %s31, 0
      %p243 = por %p241, %p242
      %p244 = scmp.ne.s32.totalorder %s236, %s238
      %p245 = scmp.eq.s32.totalorder %s36, 1
      %p246 = por %p244, %p245
      %p247 = scmp.ne.s32.totalorder %s238, %s239
      %p248 = scmp.eq.s32.totalorder %s36, 0
      %p249 = por %p247, %p248
      %p250 = scmp.ne.s32.totalorder %s238, %s239
      %p251 = scmp.eq.s32.totalorder %s37, 1
      %p252 = por %p250, %p251
      %p254 = scmp.ne.s32.totalorder %s239, %s253
      %p255 = scmp.eq.s32.totalorder %s37, 0
      %p256 = por %p254, %p255
      %s258 = sadd.s32 %s257, 1
      %p261 = scmp.eq.s32.totalorder %s31, 1
      %p262 = scmp.ne.s32.totalorder %s257, %s259
      %p263 = scmp.eq.s32.totalorder %s31, 0
      %p264 = por %p262, %p263
      %p265 = scmp.ne.s32.totalorder %s257, %s259
      %p266 = scmp.eq.s32.totalorder %s36, 1
      %p267 = por %p265, %p266
      %p268 = scmp.ne.s32.totalorder %s259, %s260
      %p269 = scmp.eq.s32.totalorder %s36, 0
      %p270 = por %p268, %p269
      %p271 = scmp.ne.s32.totalorder %s259, %s260
      %p272 = scmp.eq.s32.totalorder %s37, 1
      %p273 = por %p271, %p272
      %p275 = scmp.ne.s32.totalorder %s260, %s274
      %p276 = scmp.eq.s32.totalorder %s37, 0
      %p277 = por %p275, %p276
      %s279 = sadd.s32 %s278, 1
      %p282 = scmp.eq.s32.totalorder %s31, 1
      %p283 = scmp.ne.s32.totalorder %s278, %s280
      %p284 = scmp.eq.s32.totalorder %s31, 0
      %p285 = por %p283, %p284
      %p286 = scmp.ne.s32.totalorder %s278, %s280
      %p287 = scmp.eq.s32.totalorder %s36, 1
      %p288 = por %p286, %p287
      %p289 = scmp.ne.s32.totalorder %s280, %s281
      %p290 = scmp.eq.s32.totalorder %s36, 0
      %p291 = por %p289, %p290
      %p292 = scmp.ne.s32.totalorder %s280, %s281
      %p293 = scmp.eq.s32.totalorder %s37, 1
      %p294 = por %p292, %p293
      %p296 = scmp.ne.s32.totalorder %s281, %s295
      %p297 = scmp.eq.s32.totalorder %s37, 0
      %p298 = por %p296, %p297
      %s300 = sadd.s32 %s299, 1
      %p303 = scmp.eq.s32.totalorder %s31, 1
      %p304 = scmp.ne.s32.totalorder %s299, %s301
      %p305 = scmp.eq.s32.totalorder %s31, 0
      %p306 = por %p304, %p305
      %p307 = scmp.ne.s32.totalorder %s299, %s301
      %p308 = scmp.eq.s32.totalorder %s36, 1
      %p309 = por %p307, %p308
      %p310 = scmp.ne.s32.totalorder %s301, %s302
      %p311 = scmp.eq.s32.totalorder %s36, 0
      %p312 = por %p310, %p311
      %p313 = scmp.ne.s32.totalorder %s301, %s302
      %p314 = scmp.eq.s32.totalorder %s37, 1
      %p315 = por %p313, %p314
      %p317 = scmp.ne.s32.totalorder %s302, %s316
      %p318 = scmp.eq.s32.totalorder %s37, 0
      %p319 = por %p317, %p318
      %s321 = sadd.s32 %s320, 1
      %p324 = scmp.eq.s32.totalorder %s31, 1
      %p325 = scmp.ne.s32.totalorder %s320, %s322
      %p326 = scmp.eq.s32.totalorder %s31, 0
      %p327 = por %p325, %p326
      %p328 = scmp.ne.s32.totalorder %s320, %s322
      %p329 = scmp.eq.s32.totalorder %s36, 1
      %p330 = por %p328, %p329
      %p331 = scmp.ne.s32.totalorder %s322, %s323
      %p332 = scmp.eq.s32.totalorder %s36, 0
      %p333 = por %p331, %p332
      %p334 = scmp.ne.s32.totalorder %s322, %s323
      %p335 = scmp.eq.s32.totalorder %s37, 1
      %p336 = por %p334, %p335
      %p338 = scmp.ne.s32.totalorder %s323, %s337
      %p339 = scmp.eq.s32.totalorder %s37, 0
      %p340 = por %p338, %p339
      %s341 = ssub.s32 %s38, %s50
      %s342 = ssub.s32 %s39, %s46
      %s343 = sor.u32 %s341, %s342
      %p344 = scmp.eq.s32.totalorder %s343, 0
      %s346 = sadd.s32 %s345, 1
      %s347 = scalar_select %p344, %s345, %s346
      %p350 = pneg %p344
      %p351 = scmp.eq.s32.totalorder %s31, 1
      %p352 = por %p350, %p351
      %p353 = scmp.ne.s32.totalorder %s345, %s348
      %p354 = scmp.eq.s32.totalorder %s31, 0
      %p355 = por %p353, %p354
      %p356 = scmp.ne.s32.totalorder %s345, %s348
      %p357 = scmp.eq.s32.totalorder %s36, 1
      %p358 = por %p356, %p357
      %p359 = scmp.ne.s32.totalorder %s348, %s349
      %p360 = scmp.eq.s32.totalorder %s36, 0
      %p361 = por %p359, %p360
      %p362 = scmp.ne.s32.totalorder %s348, %s349
      %p363 = scmp.eq.s32.totalorder %s37, 1
      %p364 = por %p362, %p363
      %p366 = scmp.ne.s32.totalorder %s349, %s365
      %p367 = scmp.eq.s32.totalorder %s37, 0
      %p368 = por %p366, %p367
      %p369 = scmp.le.s32.totalorder 1, %s31
      %p370 = scmp.lt.s32.totalorder %s31, 3
      %p371 = pnand %p369, %p370
      %p372 = pneg %p371
      // Predicated region
      $region9: #{tpu_custom_call.1} parent=5 // pred_check
        _
      $region10: #{tpu_custom_call.1} parent=5 // pred_check_branch
        %374 = sbr.rel (%p371) target = $region12
      $region11: #{tpu_custom_call.1} parent=5 // pred_region
        %s375 = ssub.s32 %s31, 1
        // Predicated region
        $region13: #{tpu_custom_call.1} parent=11 // pred_check
          %p376 = pneg %p144
        $region14: #{tpu_custom_call.1} parent=11 // pred_check_branch
          %378 = sbr.rel (%p376) target = $region16
        $region15: #{tpu_custom_call.1} parent=11 // pred_region
          %s380 = ssub.s32 256, 256
          %381 = vsyncadd [#allocation11], %s380
          %s382 = sshll.u32 [#allocation10], 4
          %s383 = int_to_ptr.vmem [resolvable:$true] %s382
          %388 = dma.hbm_to_vmem [thread:$0]  %s3, 256, %s383, [#allocation11], 64, 64, 4
        $region16: #{tpu_custom_call.1} parent=11 // pred_fallthru
          _
        // Predicated region
        $region17: #{tpu_custom_call.1} parent=11 // pred_check
          %p389 = pneg %p165
        $region18: #{tpu_custom_call.1} parent=11 // pred_check_branch
          %391 = sbr.rel (%p389) target = $region20
        $region19: #{tpu_custom_call.1} parent=11 // pred_region
          %s393 = ssub.s32 16, 16
          %394 = vsyncadd [#allocation11], %s393
          %s396 = sshll.u32 [#allocation12], 4
          %s397 = int_to_ptr.vmem [resolvable:$true] %s396
          %399 = dma.hbm_to_vmem [thread:$0]  %s4, 16, %s397, [#allocation11]
        $region20: #{tpu_custom_call.1} parent=11 // pred_fallthru
          _
        // Predicated region
        $region21: #{tpu_custom_call.1} parent=11 // pred_check
          %p400 = pneg %p186
        $region22: #{tpu_custom_call.1} parent=11 // pred_check_branch
          %402 = sbr.rel (%p400) target = $region24
        $region23: #{tpu_custom_call.1} parent=11 // pred_region
          %s404 = ssub.s32 256, 256
          %405 = vsyncadd [#allocation14], %s404
          %s406 = sshll.u32 [#allocation13], 4
          %s407 = int_to_ptr.vmem [resolvable:$true] %s406
          %412 = dma.hbm_to_vmem [thread:$0]  %s5, 256, %s407, [#allocation14], 64, 64, 4
        $region24: #{tpu_custom_call.1} parent=11 // pred_fallthru
          _
        // Predicated region
        $region25: #{tpu_custom_call.1} parent=11 // pred_check
          %p413 = pneg %p207
        $region26: #{tpu_custom_call.1} parent=11 // pred_check_branch
          %415 = sbr.rel (%p413) target = $region28
        $region27: #{tpu_custom_call.1} parent=11 // pred_region
          %s417 = ssub.s32 16, 16
          %418 = vsyncadd [#allocation14], %s417
          %s420 = sshll.u32 [#allocation15], 4
          %s421 = int_to_ptr.vmem [resolvable:$true] %s420
          %423 = dma.hbm_to_vmem [thread:$0]  %s6, 16, %s421, [#allocation14]
        $region28: #{tpu_custom_call.1} parent=11 // pred_fallthru
          _
        // Predicated region
        $region29: #{tpu_custom_call.1} parent=11 // pred_check
          %p424 = pneg %p228
        $region30: #{tpu_custom_call.1} parent=11 // pred_check_branch
          %426 = sbr.rel (%p424) target = $region32
        $region31: #{tpu_custom_call.1} parent=11 // pred_region
          %s428 = ssub.s32 256, 256
          %429 = vsyncadd [#allocation17], %s428
          %s430 = sshll.u32 [#allocation16], 4
          %s431 = int_to_ptr.vmem [resolvable:$true] %s430
          %436 = dma.hbm_to_vmem [thread:$0]  %s7, 256, %s431, [#allocation17], 64, 64, 4
        $region32: #{tpu_custom_call.1} parent=11 // pred_fallthru
          _
        // Predicated region
        $region33: #{tpu_custom_call.1} parent=11 // pred_check
          %p437 = pneg %p249
        $region34: #{tpu_custom_call.1} parent=11 // pred_check_branch
          %439 = sbr.rel (%p437) target = $region36
        $region35: #{tpu_custom_call.1} parent=11 // pred_region
          %s441 = ssub.s32 16, 16
          %442 = vsyncadd [#allocation17], %s441
          %s444 = sshll.u32 [#allocation18], 4
          %s445 = int_to_ptr.vmem [resolvable:$true] %s444
          %447 = dma.hbm_to_vmem [thread:$0]  %s8, 16, %s445, [#allocation17]
        $region36: #{tpu_custom_call.1} parent=11 // pred_fallthru
          _
        // Predicated region
        $region37: #{tpu_custom_call.1} parent=11 // pred_check
          %p448 = pneg %p270
        $region38: #{tpu_custom_call.1} parent=11 // pred_check_branch
          %450 = sbr.rel (%p448) target = $region40
        $region39: #{tpu_custom_call.1} parent=11 // pred_region
          _
        $region40: #{tpu_custom_call.1} parent=11 // pred_fallthru
          _
        // Predicated region
        $region41: #{tpu_custom_call.1} parent=11 // pred_check
          %p451 = pneg %p291
        $region42: #{tpu_custom_call.1} parent=11 // pred_check_branch
          %453 = sbr.rel (%p451) target = $region44
        $region43: #{tpu_custom_call.1} parent=11 // pred_region
          _
        $region44: #{tpu_custom_call.1} parent=11 // pred_fallthru
          _
        // Predicated region
        $region45: #{tpu_custom_call.1} parent=11 // pred_check
          %p454 = pneg %p312
        $region46: #{tpu_custom_call.1} parent=11 // pred_check_branch
          %456 = sbr.rel (%p454) target = $region48
        $region47: #{tpu_custom_call.1} parent=11 // pred_region
          _
        $region48: #{tpu_custom_call.1} parent=11 // pred_fallthru
          _
        // Predicated region
        $region49: #{tpu_custom_call.1} parent=11 // pred_check
          %p457 = pneg %p333
        $region50: #{tpu_custom_call.1} parent=11 // pred_check_branch
          %459 = sbr.rel (%p457) target = $region52
        $region51: #{tpu_custom_call.1} parent=11 // pred_region
          _
        $region52: #{tpu_custom_call.1} parent=11 // pred_fallthru
          _
      $region12: #{tpu_custom_call.1} parent=5 // pred_fallthru
        _
      %p460 = scmp.lt.s32.totalorder %s31, 2
      // Predicated region
      $region53: #{tpu_custom_call.1} parent=5 // pred_check
        %p461 = pneg %p460
      $region54: #{tpu_custom_call.1} parent=5 // pred_check_branch
        %463 = sbr.rel (%p461) target = $region56
      $region55: #{tpu_custom_call.1} parent=5 // pred_region
        // Predicated region
        $region57: #{tpu_custom_call.1} parent=55 // pred_check
          %p464 = pneg %p65
        $region58: #{tpu_custom_call.1} parent=55 // pred_check_branch
          %466 = sbr.rel (%p464) target = $region60
        $region59: #{tpu_custom_call.1} parent=55 // pred_region
          %s467 = sand.u32 %s55, 1
          %s468 = scalar_lea.sflag [#allocation5], %s467
          %s469 = sand.u32 %s55, 1
          %s470 = smul.addr %s469, 8
          %s471 = scalar_lea.vmem [#allocation4], %s470
          %s473 = ssub.s32 128, 128
          %474 = vsyncadd %s468, %s473
          %s475 = sadd.s32 %s39, %s38
          %s476 = smul.addr %s475, 128
          %s477 = scalar_lea.hbm %s0, %s476
          %s479 = sshll.u32 %s471, 4
          %s480 = int_to_ptr.vmem [resolvable:$true] %s479
          %482 = dma.hbm_to_vmem [thread:$0]  %s477, 128, %s480, %s468
        $region60: #{tpu_custom_call.1} parent=55 // pred_fallthru
          _
        // Predicated region
        $region61: #{tpu_custom_call.1} parent=55 // pred_check
          %p483 = pneg %p91
        $region62: #{tpu_custom_call.1} parent=55 // pred_check_branch
          %485 = sbr.rel (%p483) target = $region64
        $region63: #{tpu_custom_call.1} parent=55 // pred_region
          %s486 = sand.u32 %s31, 1
          %s487 = scalar_lea.sflag [#allocation8], %s486
          %s488 = sand.u32 %s81, 1
          %s489 = smul.addr %s488, 8
          %s490 = scalar_lea.vmem [#allocation7], %s489
          %s492 = ssub.s32 128, 128
          %493 = vsyncadd %s487, %s492
          %s494 = smul.addr %s38, 2
          %s495 = smul.addr %s494, 64
          %s496 = scalar_lea.hbm %s1, %s495
          %s497 = sshll.u32 %s490, 4
          %s498 = int_to_ptr.vmem [resolvable:$true] %s497
          %503 = dma.hbm_to_vmem [thread:$0]  %s496, 128, %s498, %s487, 64, 64, 4
        $region64: #{tpu_custom_call.1} parent=55 // pred_fallthru
          _
        // Predicated region
        $region65: #{tpu_custom_call.1} parent=55 // pred_check
          %p504 = pneg %p117
        $region66: #{tpu_custom_call.1} parent=55 // pred_check_branch
          %506 = sbr.rel (%p504) target = $region68
        $region67: #{tpu_custom_call.1} parent=55 // pred_region
          %s507 = sand.u32 %s31, 1
          %s508 = scalar_lea.sflag [#allocation8], %s507
          %s509 = sand.u32 %s107, 1
          %s510 = smul.addr %s509, 8
          %s511 = scalar_lea.vmem [#allocation9], %s510
          %s513 = ssub.s32 128, 128
          %514 = vsyncadd %s508, %s513
          %s515 = smul.addr %s38, 2
          %s516 = smul.addr %s515, 64
          %s517 = scalar_lea.hbm %s2, %s516
          %s518 = sshll.u32 %s511, 4
          %s519 = int_to_ptr.vmem [resolvable:$true] %s518
          %524 = dma.hbm_to_vmem [thread:$0]  %s517, 128, %s519, %s508, 64, 64, 4
        $region68: #{tpu_custom_call.1} parent=55 // pred_fallthru
          _
      $region56: #{tpu_custom_call.1} parent=5 // pred_fallthru
        _
      %p525 = scmp.le.s32.totalorder 1, %s31
      %p526 = scmp.lt.s32.totalorder %s31, 3
      %p527 = pnand %p525, %p526
      %p528 = pneg %p527
      // Predicated region
      $region69: #{tpu_custom_call.1} parent=5 // pred_check
        _
      $region70: #{tpu_custom_call.1} parent=5 // pred_check_branch
        %530 = sbr.rel (%p527) target = $region72
      $region71: #{tpu_custom_call.1} parent=5 // pred_region
        %s531 = ssub.s32 %s31, 1
        %s532 = sand.u32 %s58, 1
        %s533 = scalar_lea.sflag [#allocation5], %s532
        %s534 = sand.u32 %s58, 1
        %s535 = smul.addr %s534, 8
        %s536 = scalar_lea.vmem [#allocation4], %s535
        // Predicated region
        $region73: #{tpu_custom_call.1} parent=71 // pred_check
          %p537 = pneg %p71
        $region74: #{tpu_custom_call.1} parent=71 // pred_check_branch
          %539 = sbr.rel (%p537) target = $region76
        $region75: #{tpu_custom_call.1} parent=71 // pred_region
          %540 = dma.done %s533, 128
        $region76: #{tpu_custom_call.1} parent=71 // pred_fallthru
          _
        %s541 = sand.u32 %s36, 1
        %s542 = scalar_lea.sflag [#allocation8], %s541
        %s543 = sand.u32 %s84, 1
        %s544 = smul.addr %s543, 8
        %s545 = scalar_lea.vmem [#allocation7], %s544
        // Predicated region
        $region77: #{tpu_custom_call.1} parent=71 // pred_check
          %p546 = pneg %p97
        $region78: #{tpu_custom_call.1} parent=71 // pred_check_branch
          %548 = sbr.rel (%p546) target = $region80
        $region79: #{tpu_custom_call.1} parent=71 // pred_region
          %549 = dma.done %s542, 128
        $region80: #{tpu_custom_call.1} parent=71 // pred_fallthru
          _
        %s550 = sand.u32 %s36, 1
        %s551 = scalar_lea.sflag [#allocation8], %s550
        %s552 = sand.u32 %s110, 1
        %s553 = smul.addr %s552, 8
        %s554 = scalar_lea.vmem [#allocation9], %s553
        // Predicated region
        $region81: #{tpu_custom_call.1} parent=71 // pred_check
          %p555 = pneg %p123
        $region82: #{tpu_custom_call.1} parent=71 // pred_check_branch
          %557 = sbr.rel (%p555) target = $region84
        $region83: #{tpu_custom_call.1} parent=71 // pred_region
          %558 = dma.done %s551, 128
        $region84: #{tpu_custom_call.1} parent=71 // pred_fallthru
          _
        // Predicated region
        $region85: #{tpu_custom_call.1} parent=71 // pred_check
          %p559 = pneg %p144
        $region86: #{tpu_custom_call.1} parent=71 // pred_check_branch
          %561 = sbr.rel (%p559) target = $region88
        $region87: #{tpu_custom_call.1} parent=71 // pred_region
          %562 = dma.done [#allocation11], 256
        $region88: #{tpu_custom_call.1} parent=71 // pred_fallthru
          _
        // Predicated region
        $region89: #{tpu_custom_call.1} parent=71 // pred_check
          %p563 = pneg %p165
        $region90: #{tpu_custom_call.1} parent=71 // pred_check_branch
          %565 = sbr.rel (%p563) target = $region92
        $region91: #{tpu_custom_call.1} parent=71 // pred_region
          %566 = dma.done [#allocation11], 16
        $region92: #{tpu_custom_call.1} parent=71 // pred_fallthru
          _
        // Predicated region
        $region93: #{tpu_custom_call.1} parent=71 // pred_check
          %p567 = pneg %p186
        $region94: #{tpu_custom_call.1} parent=71 // pred_check_branch
          %569 = sbr.rel (%p567) target = $region96
        $region95: #{tpu_custom_call.1} parent=71 // pred_region
          %570 = dma.done [#allocation14], 256
        $region96: #{tpu_custom_call.1} parent=71 // pred_fallthru
          _
        // Predicated region
        $region97: #{tpu_custom_call.1} parent=71 // pred_check
          %p571 = pneg %p207
        $region98: #{tpu_custom_call.1} parent=71 // pred_check_branch
          %573 = sbr.rel (%p571) target = $region100
        $region99: #{tpu_custom_call.1} parent=71 // pred_region
          %574 = dma.done [#allocation14], 16
        $region100: #{tpu_custom_call.1} parent=71 // pred_fallthru
          _
        // Predicated region
        $region101: #{tpu_custom_call.1} parent=71 // pred_check
          %p575 = pneg %p228
        $region102: #{tpu_custom_call.1} parent=71 // pred_check_branch
          %577 = sbr.rel (%p575) target = $region104
        $region103: #{tpu_custom_call.1} parent=71 // pred_region
          %578 = dma.done [#allocation17], 256
        $region104: #{tpu_custom_call.1} parent=71 // pred_fallthru
          _
        // Predicated region
        $region105: #{tpu_custom_call.1} parent=71 // pred_check
          %p579 = pneg %p249
        $region106: #{tpu_custom_call.1} parent=71 // pred_check_branch
          %581 = sbr.rel (%p579) target = $region108
        $region107: #{tpu_custom_call.1} parent=71 // pred_region
          %582 = dma.done [#allocation17], 16
        $region108: #{tpu_custom_call.1} parent=71 // pred_fallthru
          _
        %s583 = sand.u32 %s58, 1
        %s584 = scalar_lea.sflag [#allocation5], %s583
        %s585 = sand.u32 %s58, 1
        %s586 = smul.addr %s585, 8
        %s587 = scalar_lea.vmem [#allocation4], %s586
        %p588 = pneg %p71
        %p589 = pneg %p68
        %s590 = sand.u32 %s36, 1
        %s591 = scalar_lea.sflag [#allocation8], %s590
        %s592 = sand.u32 %s84, 1
        %s593 = smul.addr %s592, 8
        %s594 = scalar_lea.vmem [#allocation7], %s593
        %p595 = pneg %p97
        %p596 = pneg %p94
        %s597 = sand.u32 %s36, 1
        %s598 = scalar_lea.sflag [#allocation8], %s597
        %s599 = sand.u32 %s110, 1
        %s600 = smul.addr %s599, 8
        %s601 = scalar_lea.vmem [#allocation9], %s600
        %p602 = pneg %p123
        %p603 = pneg %p120
        %p604 = pneg %p144
        %p605 = pneg %p141
        %p606 = pneg %p165
        %p607 = pneg %p162
        %p608 = pneg %p186
        %p609 = pneg %p183
        %p610 = pneg %p207
        %p611 = pneg %p204
        %p612 = pneg %p228
        %p613 = pneg %p225
        %p614 = pneg %p249
        %p615 = pneg %p246
        %p616 = pneg %p270
        %p617 = pneg %p267
        %p618 = pneg %p291
        %p619 = pneg %p288
        %p620 = pneg %p312
        %p621 = pneg %p309
        %p622 = pneg %p333
        %p623 = pneg %p330
        %p624 = pneg %p361
        %p625 = pneg %p358
        %s626 = sand.u32 %s348, 1
        %s627 = scalar_lea.sflag [#allocation6], %s626
        %s628 = sand.u32 %s348, 1
        %s629 = smul.addr %s628, 8
        %s630 = scalar_lea.vmem [#allocation19], %s629
        %p632 = scmp.eq.s32.totalorder %s41, 0
        // Predicated region
        $region109: #{tpu_custom_call.1} parent=71 // pred_check
          %p633 = pneg %p632
        $region110: #{tpu_custom_call.1} parent=71 // pred_check_branch
          %635 = sbr.rel (%p633) target = $region112
        $region111: #{tpu_custom_call.1} parent=71 // pred_region
          %v636 = vld [vmem:[%s545] sm:$0xf]
          %v637 = vld [vmem:[%s545 + $0x4] sm:$0xf]
          %v638 = vld [vmem:[%s554] sm:$0xf]
          %v639 = vld [vmem:[%s554 + $0x4] sm:$0xf]
          %v640 = vld [vmem:[#allocation13] sm:$0xf]
          %v641 = vld [vmem:[#allocation13 + $0x4] sm:$0xf]
          %v642 = vld [vmem:[#allocation13 + $0x8] sm:$0xf]
          %v643 = vld [vmem:[#allocation13 + $0xc] sm:$0xf]
          %v644 = vld [vmem:[#allocation15] sm:$0x1]
          %v646 = vlaneseq
          %v647 = vshrl.u32 %v646, 7
          %v648 = vsub.s32 0, %v647
          %v649 = vrot.slane %v644, %v648
          %v653 = vunpack.c.l.b16 %v636
          %v654 = vunpack.c.l.b16 %v637
          %v655 = vpack.c.b16 %v654, %v653
          %v660 = vunpack.c.l.b16 %v640
          %v661 = vunpack.c.l.b16 %v641
          %v662 = vunpack.c.l.b16 %v642
          %v663 = vunpack.c.l.b16 %v643
          %v664 = vpack.c.b16 %v661, %v660
          %v665 = vpack.c.b16 %v663, %v662
          %vm668 = vcmask 261120
          %v670 = vsel %vm668, %v655, 0
          %672 = vmatprep.subr.bf16.mxu0 0
          %673 = vmatpush1.bf16.msra.mxu0 0
          %674 = vmatprep.subr.bf16.mxu0 0
          %675 = vmatpush1.bf16.msra.mxu0 0
          %676 = vmatprep.subr.bf16.mxu0 0
          %677 = vmatpush1.bf16.msra.mxu0 0
          %678 = vmatprep.subr.bf16.mxu0 0
          %679 = vmatpush1.bf16.msra.mxu0 0
          %680 = vmatprep.subr.bf16.mxu0 0
          %681 = vmatpush1.bf16.msra.mxu0 0
          %682 = vmatprep.subr.bf16.mxu0 0
          %683 = vmatpush1.bf16.msra.mxu0 0
          %684 = vmatprep.subr.bf16.mxu0 0
          %685 = vmatpush1.bf16.msra.mxu0 %v665
          %686 = vmatprep.subr.bf16.mxu0 0
          %687 = vmatpush1.bf16.msra.mxu0 %v664
          %688 = vmatprep.subr.bf16.mxu0 0
          %689 = vmatpush2.bf16.msra.mxu0 0
          %690 = vmatprep.subr.bf16.mxu0 0
          %691 = vmatpush2.bf16.msra.mxu0 0
          %692 = vmatprep.subr.bf16.mxu0 0
          %693 = vmatpush2.bf16.msra.mxu0 0
          %694 = vmatprep.subr.bf16.mxu0 0
          %695 = vmatpush2.bf16.msra.mxu0 0
          %696 = vmatprep.subr.bf16.mxu0 0
          %697 = vmatpush2.bf16.msra.mxu0 0
          %698 = vmatprep.subr.bf16.mxu0 0
          %699 = vmatpush2.bf16.msra.mxu0 0
          %700 = vmatprep.subr.bf16.mxu0 0
          %701 = vmatpush2.bf16.msra.mxu0 0
          %702 = vmatprep.subr.bf16.mxu0 0
          %703 = vmatpush2.bf16.msra.mxu0 0
          %704 = vmatprep.mubr.bf16.mxu0 0
          %705 = vmatmul.mubr.bf16.gmra.mxu0 %v670
          %v706 = vpop.f32.mrf.mxu0
          %v707 = vadd.f32 %v649, %v706
          %v708 = vpop.f32.mrf.mxu0
          %v709 = vpop.f32.mrf.mxu0
          %v710 = vadd.f32 %v649, %v709
          %v711 = vpop.f32.mrf.mxu0
          %712 = vdwg.mxu0
          %v713 = vld [vmem:[#allocation16] sm:$0xf]
          %v714 = vld [vmem:[#allocation16 + $0x4] sm:$0xf]
          %v715 = vld [vmem:[#allocation16 + $0x8] sm:$0xf]
          %v716 = vld [vmem:[#allocation16 + $0xc] sm:$0xf]
          %v717 = vld [vmem:[#allocation18] sm:$0x1]
          %v719 = vlaneseq
          %v720 = vshrl.u32 %v719, 7
          %v721 = vsub.s32 0, %v720
          %v722 = vrot.slane %v717, %v721
          %v726 = vunpack.c.l.b16 %v638
          %v727 = vunpack.c.l.b16 %v639
          %v728 = vpack.c.b16 %v727, %v726
          %v733 = vunpack.c.l.b16 %v713
          %v734 = vunpack.c.l.b16 %v714
          %v735 = vunpack.c.l.b16 %v715
          %v736 = vunpack.c.l.b16 %v716
          %v737 = vpack.c.b16 %v734, %v733
          %v738 = vpack.c.b16 %v736, %v735
          %v742 = vsel %vm668, %v728, 0
          %744 = vmatprep.subr.bf16.mxu0 0
          %745 = vmatpush1.bf16.msra.mxu0 0
          %746 = vmatprep.subr.bf16.mxu0 0
          %747 = vmatpush1.bf16.msra.mxu0 0
          %748 = vmatprep.subr.bf16.mxu0 0
          %749 = vmatpush1.bf16.msra.mxu0 0
          %750 = vmatprep.subr.bf16.mxu0 0
          %751 = vmatpush1.bf16.msra.mxu0 0
          %752 = vmatprep.subr.bf16.mxu0 0
          %753 = vmatpush1.bf16.msra.mxu0 0
          %754 = vmatprep.subr.bf16.mxu0 0
          %755 = vmatpush1.bf16.msra.mxu0 0
          %756 = vmatprep.subr.bf16.mxu0 0
          %757 = vmatpush1.bf16.msra.mxu0 %v738
          %758 = vmatprep.subr.bf16.mxu0 0
          %759 = vmatpush1.bf16.msra.mxu0 %v737
          %760 = vmatprep.subr.bf16.mxu0 0
          %761 = vmatpush2.bf16.msra.mxu0 0
          %762 = vmatprep.subr.bf16.mxu0 0
          %763 = vmatpush2.bf16.msra.mxu0 0
          %764 = vmatprep.subr.bf16.mxu0 0
          %765 = vmatpush2.bf16.msra.mxu0 0
          %766 = vmatprep.subr.bf16.mxu0 0
          %767 = vmatpush2.bf16.msra.mxu0 0
          %768 = vmatprep.subr.bf16.mxu0 0
          %769 = vmatpush2.bf16.msra.mxu0 0
          %770 = vmatprep.subr.bf16.mxu0 0
          %771 = vmatpush2.bf16.msra.mxu0 0
          %772 = vmatprep.subr.bf16.mxu0 0
          %773 = vmatpush2.bf16.msra.mxu0 0
          %774 = vmatprep.subr.bf16.mxu0 0
          %775 = vmatpush2.bf16.msra.mxu0 0
          %776 = vmatprep.mubr.bf16.mxu0 0
          %777 = vmatmul.mubr.bf16.gmra.mxu0 %v742
          %v778 = vpop.f32.mrf.mxu0
          %v779 = vadd.f32 %v722, %v778
          %v780 = vpop.f32.mrf.mxu0
          %v781 = vpop.f32.mrf.mxu0
          %v782 = vadd.f32 %v722, %v781
          %v783 = vpop.f32.mrf.mxu0
          %784 = vdwg.mxu0
          %787 = vrot.lane.b32.xlu0 %v707, 120
          %v788 = vpop.permute.xlu0 %787
          %789 = vrot.lane.b32.xlu0 %v710, 120
          %v790 = vpop.permute.xlu0 %789
          %793 = vrot.lane.b32.xlu0 %v707, 112
          %v794 = vpop.permute.xlu0 %793
          %795 = vrot.lane.b32.xlu0 %v710, 112
          %v796 = vpop.permute.xlu0 %795
          %799 = vrot.lane.b32.xlu0 %v707, 104
          %v800 = vpop.permute.xlu0 %799
          %801 = vrot.lane.b32.xlu0 %v710, 104
          %v802 = vpop.permute.xlu0 %801
          %v805 = vpack.c.bf16 %v710, %v707
          %v806 = vpack.c.bf16 %v790, %v788
          %v807 = vpack.c.bf16 %v796, %v794
          %v808 = vpack.c.bf16 %v802, %v800
          %v813 = vunpack.c.l.b16 %v805
          %v814 = vunpack.c.h.b16 %v805
          %v815 = vunpack.c.l.b16 %v806
          %v816 = vunpack.c.h.b16 %v806
          %v817 = vunpack.c.l.b16 %v807
          %v818 = vunpack.c.h.b16 %v807
          %v819 = vunpack.c.l.b16 %v808
          %v820 = vunpack.c.h.b16 %v808
          %v821 = vpack.c.b16 %v813, %v813
          %v822 = vpack.c.b16 %v814, %v814
          %v823 = vpack.c.b16 %v815, %v815
          %v824 = vpack.c.b16 %v816, %v816
          %v825 = vpack.c.b16 %v817, %v817
          %v826 = vpack.c.b16 %v818, %v818
          %v827 = vpack.c.b16 %v819, %v819
          %v828 = vpack.c.b16 %v820, %v820
          %vm837 = vcmask 60416
          %838 = vst.msk [vmem:[#allocation2] sm:$0xf] %vm837, %v821
          %839 = vst.msk [vmem:[#allocation2 + $0x4] sm:$0xf] %vm837, %v822
          %840 = vst.msk [vmem:[#allocation2 + $0x8] sm:$0xf] %vm837, %v823
          %841 = vst.msk [vmem:[#allocation2 + $0xc] sm:$0xf] %vm837, %v824
          %842 = vst.msk [vmem:[#allocation2 + $0x10] sm:$0xf] %vm837, %v825
          %843 = vst.msk [vmem:[#allocation2 + $0x14] sm:$0xf] %vm837, %v826
          %844 = vst.msk [vmem:[#allocation2 + $0x18] sm:$0xf] %vm837, %v827
          %845 = vst.msk [vmem:[#allocation2 + $0x1c] sm:$0xf] %vm837, %v828
          %848 = vrot.lane.b32.xlu0 %v779, 120
          %v849 = vpop.permute.xlu0 %848
          %850 = vrot.lane.b32.xlu0 %v782, 120
          %v851 = vpop.permute.xlu0 %850
          %854 = vrot.lane.b32.xlu0 %v779, 112
          %v855 = vpop.permute.xlu0 %854
          %856 = vrot.lane.b32.xlu0 %v782, 112
          %v857 = vpop.permute.xlu0 %856
          %860 = vrot.lane.b32.xlu0 %v779, 104
          %v861 = vpop.permute.xlu0 %860
          %862 = vrot.lane.b32.xlu0 %v782, 104
          %v863 = vpop.permute.xlu0 %862
          %v866 = vpack.c.bf16 %v782, %v779
          %v867 = vpack.c.bf16 %v851, %v849
          %v868 = vpack.c.bf16 %v857, %v855
          %v869 = vpack.c.bf16 %v863, %v861
          %v874 = vunpack.c.l.b16 %v866
          %v875 = vunpack.c.h.b16 %v866
          %v876 = vunpack.c.l.b16 %v867
          %v877 = vunpack.c.h.b16 %v867
          %v878 = vunpack.c.l.b16 %v868
          %v879 = vunpack.c.h.b16 %v868
          %v880 = vunpack.c.l.b16 %v869
          %v881 = vunpack.c.h.b16 %v869
          %v882 = vpack.c.b16 %v874, %v874
          %v883 = vpack.c.b16 %v875, %v875
          %v884 = vpack.c.b16 %v876, %v876
          %v885 = vpack.c.b16 %v877, %v877
          %v886 = vpack.c.b16 %v878, %v878
          %v887 = vpack.c.b16 %v879, %v879
          %v888 = vpack.c.b16 %v880, %v880
          %v889 = vpack.c.b16 %v881, %v881
          %898 = vst.msk [vmem:[#allocation3] sm:$0xf] %vm837, %v882
          %899 = vst.msk [vmem:[#allocation3 + $0x4] sm:$0xf] %vm837, %v883
          %900 = vst.msk [vmem:[#allocation3 + $0x8] sm:$0xf] %vm837, %v884
          %901 = vst.msk [vmem:[#allocation3 + $0xc] sm:$0xf] %vm837, %v885
          %902 = vst.msk [vmem:[#allocation3 + $0x10] sm:$0xf] %vm837, %v886
          %903 = vst.msk [vmem:[#allocation3 + $0x14] sm:$0xf] %vm837, %v887
          %904 = vst.msk [vmem:[#allocation3 + $0x18] sm:$0xf] %vm837, %v888
          %905 = vst.msk [vmem:[#allocation3 + $0x1c] sm:$0xf] %vm837, %v889
        $region112: #{tpu_custom_call.1} parent=71 // pred_fallthru
          _
        %v906 = vld [vmem:[%s536] sm:$0xff]
        %v907 = vpack.c.bf16 %v906, %v906
        %v908 = vld [vmem:[#allocation10] sm:$0xf]
        %v909 = vld [vmem:[#allocation10 + $0x4] sm:$0xf]
        %v910 = vld [vmem:[#allocation10 + $0x8] sm:$0xf]
        %v911 = vld [vmem:[#allocation10 + $0xc] sm:$0xf]
        %v912 = vld [vmem:[#allocation12] sm:$0x1]
        %v914 = vlaneseq
        %v915 = vshrl.u32 %v914, 7
        %v916 = vsub.s32 0, %v915
        %v917 = vrot.slane %v912, %v916
        %v923 = vunpack.c.l.b16 %v908
        %v924 = vunpack.c.l.b16 %v909
        %v925 = vunpack.c.l.b16 %v910
        %v926 = vunpack.c.l.b16 %v911
        %v927 = vpack.c.b16 %v924, %v923
        %v928 = vpack.c.b16 %v926, %v925
        %vm931 = vcmask 261120
        %v933 = vsel %vm931, %v907, 0
        %935 = vmatprep.subr.bf16.mxu0 0
        %936 = vmatpush1.bf16.msra.mxu0 0
        %937 = vmatprep.subr.bf16.mxu0 0
        %938 = vmatpush1.bf16.msra.mxu0 0
        %939 = vmatprep.subr.bf16.mxu0 0
        %940 = vmatpush1.bf16.msra.mxu0 0
        %941 = vmatprep.subr.bf16.mxu0 0
        %942 = vmatpush1.bf16.msra.mxu0 0
        %943 = vmatprep.subr.bf16.mxu0 0
        %944 = vmatpush1.bf16.msra.mxu0 0
        %945 = vmatprep.subr.bf16.mxu0 0
        %946 = vmatpush1.bf16.msra.mxu0 0
        %947 = vmatprep.subr.bf16.mxu0 0
        %948 = vmatpush1.bf16.msra.mxu0 %v928
        %949 = vmatprep.subr.bf16.mxu0 0
        %950 = vmatpush1.bf16.msra.mxu0 %v927
        %951 = vmatprep.subr.bf16.mxu0 0
        %952 = vmatpush2.bf16.msra.mxu0 0
        %953 = vmatprep.subr.bf16.mxu0 0
        %954 = vmatpush2.bf16.msra.mxu0 0
        %955 = vmatprep.subr.bf16.mxu0 0
        %956 = vmatpush2.bf16.msra.mxu0 0
        %957 = vmatprep.subr.bf16.mxu0 0
        %958 = vmatpush2.bf16.msra.mxu0 0
        %959 = vmatprep.subr.bf16.mxu0 0
        %960 = vmatpush2.bf16.msra.mxu0 0
        %961 = vmatprep.subr.bf16.mxu0 0
        %962 = vmatpush2.bf16.msra.mxu0 0
        %963 = vmatprep.subr.bf16.mxu0 0
        %964 = vmatpush2.bf16.msra.mxu0 0
        %965 = vmatprep.subr.bf16.mxu0 0
        %966 = vmatpush2.bf16.msra.mxu0 0
        %967 = vmatprep.mubr.bf16.mxu0 0
        %968 = vmatmul.mubr.bf16.gmra.mxu0 %v933
        %v969 = vpop.f32.mrf.mxu0
        %v970 = vadd.f32 %v917, %v969
        %v971 = vpop.f32.mrf.mxu0
        %v972 = vpop.f32.mrf.mxu0
        %v973 = vpop.f32.mrf.mxu0
        %974 = vdwg.mxu0
        %v975 = vmul.f32 %v970, 0.35355338
        %977 = vrot.lane.b32.xlu0 %v975, 120
        %v978 = vpop.permute.xlu0 %977
        %980 = vrot.lane.b32.xlu0 %v975, 112
        %v981 = vpop.permute.xlu0 %980
        %983 = vrot.lane.b32.xlu0 %v975, 104
        %v984 = vpop.permute.xlu0 %983
        %v986 = vpack.c.bf16 %v975, %v975
        %v987 = vpack.c.bf16 %v978, %v978
        %v988 = vpack.c.bf16 %v981, %v981
        %v989 = vpack.c.bf16 %v984, %v984
        %v990 = vld [vmem:[#allocation2] sm:$0xf]
        %v991 = vld [vmem:[#allocation2 + $0x4] sm:$0xf]
        %v992 = vld [vmem:[#allocation2 + $0x8] sm:$0xf]
        %v993 = vld [vmem:[#allocation2 + $0xc] sm:$0xf]
        %v994 = vld [vmem:[#allocation2 + $0x10] sm:$0xf]
        %v995 = vld [vmem:[#allocation2 + $0x14] sm:$0xf]
        %v996 = vld [vmem:[#allocation2 + $0x18] sm:$0xf]
        %v997 = vld [vmem:[#allocation2 + $0x1c] sm:$0xf]
        %v998 = vld [vmem:[#allocation3] sm:$0xf]
        %v999 = vld [vmem:[#allocation3 + $0x4] sm:$0xf]
        %v1000 = vld [vmem:[#allocation3 + $0x8] sm:$0xf]
        %v1001 = vld [vmem:[#allocation3 + $0xc] sm:$0xf]
        %v1002 = vld [vmem:[#allocation3 + $0x10] sm:$0xf]
        %v1003 = vld [vmem:[#allocation3 + $0x14] sm:$0xf]
        %v1004 = vld [vmem:[#allocation3 + $0x18] sm:$0xf]
        %v1005 = vld [vmem:[#allocation3 + $0x1c] sm:$0xf]
        %v1008 = vunpack.c.l.b16 %v990
        %v1009 = vunpack.c.l.b16 %v991
        %v1010 = vpack.c.b16 %v1009, %v1008
        %vm1011 = vcmask 64512
        %v1013 = vsel %vm1011, %v986, 0
        %v1016 = vsel %vm1011, %v1010, 0
        %1018 = vmatprep.subr.bf16.mxu0 0
        %1019 = vmatpush1.bf16.xpose.msra.mxu0 0
        %1020 = vmatprep.subr.bf16.mxu0 0
        %1021 = vmatpush1.bf16.xpose.msra.mxu0 0
        %1022 = vmatprep.subr.bf16.mxu0 0
        %1023 = vmatpush1.bf16.xpose.msra.mxu0 0
        %1024 = vmatprep.subr.bf16.mxu0 0
        %1025 = vmatpush1.bf16.xpose.msra.mxu0 0
        %1026 = vmatprep.subr.bf16.mxu0 0
        %1027 = vmatpush1.bf16.xpose.msra.mxu0 0
        %1028 = vmatprep.subr.bf16.mxu0 0
        %1029 = vmatpush1.bf16.xpose.msra.mxu0 0
        %1030 = vmatprep.subr.bf16.mxu0 0
        %1031 = vmatpush1.bf16.xpose.msra.mxu0 0
        %1032 = vmatprep.subr.bf16.mxu0 0
        %1033 = vmatpush1.bf16.xpose.msra.mxu0 %v1016
        %1034 = vmatprep.subr.bf16.mxu0 0
        %1035 = vmatpush2.bf16.xpose.msra.mxu0 0
        %1036 = vmatprep.subr.bf16.mxu0 0
        %1037 = vmatpush2.bf16.xpose.msra.mxu0 0
        %1038 = vmatprep.subr.bf16.mxu0 0
        %1039 = vmatpush2.bf16.xpose.msra.mxu0 0
        %1040 = vmatprep.subr.bf16.mxu0 0
        %1041 = vmatpush2.bf16.xpose.msra.mxu0 0
        %1042 = vmatprep.subr.bf16.mxu0 0
        %1043 = vmatpush2.bf16.xpose.msra.mxu0 0
        %1044 = vmatprep.subr.bf16.mxu0 0
        %1045 = vmatpush2.bf16.xpose.msra.mxu0 0
        %1046 = vmatprep.subr.bf16.mxu0 0
        %1047 = vmatpush2.bf16.xpose.msra.mxu0 0
        %1048 = vmatprep.subr.bf16.mxu0 0
        %1049 = vmatpush2.bf16.xpose.msra.mxu0 0
        %1050 = vmatprep.mubr.bf16.mxu0 0
        %1051 = vmatmul.mubr.bf16.gmra.mxu0 %v1013
        %v1052 = vpop.f32.mrf.mxu0
        %v1053 = vadd.f32 0.0, %v1052
        %v1054 = vpop.f32.mrf.mxu0
        %v1055 = vpop.f32.mrf.mxu0
        %v1056 = vpop.f32.mrf.mxu0
        %1057 = vdwg.mxu0
        %v1060 = vunpack.c.l.b16 %v992
        %v1061 = vunpack.c.l.b16 %v993
        %v1062 = vpack.c.b16 %v1061, %v1060
        %v1064 = vsel %vm1011, %v987, 0
        %v1067 = vsel %vm1011, %v1062, 0
        %1069 = vmatprep.subr.bf16.mxu0 0
        %1070 = vmatpush1.bf16.xpose.msra.mxu0 0
        %1071 = vmatprep.subr.bf16.mxu0 0
        %1072 = vmatpush1.bf16.xpose.msra.mxu0 0
        %1073 = vmatprep.subr.bf16.mxu0 0
        %1074 = vmatpush1.bf16.xpose.msra.mxu0 0
        %1075 = vmatprep.subr.bf16.mxu0 0
        %1076 = vmatpush1.bf16.xpose.msra.mxu0 0
        %1077 = vmatprep.subr.bf16.mxu0 0
        %1078 = vmatpush1.bf16.xpose.msra.mxu0 0
        %1079 = vmatprep.subr.bf16.mxu0 0
        %1080 = vmatpush1.bf16.xpose.msra.mxu0 0
        %1081 = vmatprep.subr.bf16.mxu0 0
        %1082 = vmatpush1.bf16.xpose.msra.mxu0 0
        %1083 = vmatprep.subr.bf16.mxu0 0
        %1084 = vmatpush1.bf16.xpose.msra.mxu0 %v1067
        %1085 = vmatprep.subr.bf16.mxu0 0
        %1086 = vmatpush2.bf16.xpose.msra.mxu0 0
        %1087 = vmatprep.subr.bf16.mxu0 0
        %1088 = vmatpush2.bf16.xpose.msra.mxu0 0
        %1089 = vmatprep.subr.bf16.mxu0 0
        %1090 = vmatpush2.bf16.xpose.msra.mxu0 0
        %1091 = vmatprep.subr.bf16.mxu0 0
        %1092 = vmatpush2.bf16.xpose.msra.mxu0 0
        %1093 = vmatprep.subr.bf16.mxu0 0
        %1094 = vmatpush2.bf16.xpose.msra.mxu0 0
        %1095 = vmatprep.subr.bf16.mxu0 0
        %1096 = vmatpush2.bf16.xpose.msra.mxu0 0
        %1097 = vmatprep.subr.bf16.mxu0 0
        %1098 = vmatpush2.bf16.xpose.msra.mxu0 0
        %1099 = vmatprep.subr.bf16.mxu0 0
        %1100 = vmatpush2.bf16.xpose.msra.mxu0 0
        %1101 = vmatprep.mubr.bf16.mxu0 0
        %1102 = vmatmul.mubr.bf16.gmra.mxu0 %v1064
        %v1103 = vpop.f32.mrf.mxu0
        %v1104 = vadd.f32 0.0, %v1103
        %v1105 = vpop.f32.mrf.mxu0
        %v1106 = vpop.f32.mrf.mxu0
        %v1107 = vpop.f32.mrf.mxu0
        %1108 = vdwg.mxu0
        %v1111 = vunpack.c.l.b16 %v994
        %v1112 = vunpack.c.l.b16 %v995
        %v1113 = vpack.c.b16 %v1112, %v1111
        %v1115 = vsel %vm1011, %v988, 0
        %v1118 = vsel %vm1011, %v1113, 0
        %1120 = vmatprep.subr.bf16.mxu0 0
        %1121 = vmatpush1.bf16.xpose.msra.mxu0 0
        %1122 = vmatprep.subr.bf16.mxu0 0
        %1123 = vmatpush1.bf16.xpose.msra.mxu0 0
        %1124 = vmatprep.subr.bf16.mxu0 0
        %1125 = vmatpush1.bf16.xpose.msra.mxu0 0
        %1126 = vmatprep.subr.bf16.mxu0 0
        %1127 = vmatpush1.bf16.xpose.msra.mxu0 0
        %1128 = vmatprep.subr.bf16.mxu0 0
        %1129 = vmatpush1.bf16.xpose.msra.mxu0 0
        %1130 = vmatprep.subr.bf16.mxu0 0
        %1131 = vmatpush1.bf16.xpose.msra.mxu0 0
        %1132 = vmatprep.subr.bf16.mxu0 0
        %1133 = vmatpush1.bf16.xpose.msra.mxu0 0
        %1134 = vmatprep.subr.bf16.mxu0 0
        %1135 = vmatpush1.bf16.xpose.msra.mxu0 %v1118
        %1136 = vmatprep.subr.bf16.mxu0 0
        %1137 = vmatpush2.bf16.xpose.msra.mxu0 0
        %1138 = vmatprep.subr.bf16.mxu0 0
        %1139 = vmatpush2.bf16.xpose.msra.mxu0 0
        %1140 = vmatprep.subr.bf16.mxu0 0
        %1141 = vmatpush2.bf16.xpose.msra.mxu0 0
        %1142 = vmatprep.subr.bf16.mxu0 0
        %1143 = vmatpush2.bf16.xpose.msra.mxu0 0
        %1144 = vmatprep.subr.bf16.mxu0 0
        %1145 = vmatpush2.bf16.xpose.msra.mxu0 0
        %1146 = vmatprep.subr.bf16.mxu0 0
        %1147 = vmatpush2.bf16.xpose.msra.mxu0 0
        %1148 = vmatprep.subr.bf16.mxu0 0
        %1149 = vmatpush2.bf16.xpose.msra.mxu0 0
        %1150 = vmatprep.subr.bf16.mxu0 0
        %1151 = vmatpush2.bf16.xpose.msra.mxu0 0
        %1152 = vmatprep.mubr.bf16.mxu0 0
        %1153 = vmatmul.mubr.bf16.gmra.mxu0 %v1115
        %v1154 = vpop.f32.mrf.mxu0
        %v1155 = vadd.f32 0.0, %v1154
        %v1156 = vpop.f32.mrf.mxu0
        %v1157 = vpop.f32.mrf.mxu0
        %v1158 = vpop.f32.mrf.mxu0
        %1159 = vdwg.mxu0
        %v1162 = vunpack.c.l.b16 %v996
        %v1163 = vunpack.c.l.b16 %v997
        %v1164 = vpack.c.b16 %v1163, %v1162
        %v1166 = vsel %vm1011, %v989, 0
        %v1169 = vsel %vm1011, %v1164, 0
        %1171 = vmatprep.subr.bf16.mxu0 0
        %1172 = vmatpush1.bf16.xpose.msra.mxu0 0
        %1173 = vmatprep.subr.bf16.mxu0 0
        %1174 = vmatpush1.bf16.xpose.msra.mxu0 0
        %1175 = vmatprep.subr.bf16.mxu0 0
        %1176 = vmatpush1.bf16.xpose.msra.mxu0 0
        %1177 = vmatprep.subr.bf16.mxu0 0
        %1178 = vmatpush1.bf16.xpose.msra.mxu0 0
        %1179 = vmatprep.subr.bf16.mxu0 0
        %1180 = vmatpush1.bf16.xpose.msra.mxu0 0
        %1181 = vmatprep.subr.bf16.mxu0 0
        %1182 = vmatpush1.bf16.xpose.msra.mxu0 0
        %1183 = vmatprep.subr.bf16.mxu0 0
        %1184 = vmatpush1.bf16.xpose.msra.mxu0 0
        %1185 = vmatprep.subr.bf16.mxu0 0
        %1186 = vmatpush1.bf16.xpose.msra.mxu0 %v1169
        %1187 = vmatprep.subr.bf16.mxu0 0
        %1188 = vmatpush2.bf16.xpose.msra.mxu0 0
        %1189 = vmatprep.subr.bf16.mxu0 0
        %1190 = vmatpush2.bf16.xpose.msra.mxu0 0
        %1191 = vmatprep.subr.bf16.mxu0 0
        %1192 = vmatpush2.bf16.xpose.msra.mxu0 0
        %1193 = vmatprep.subr.bf16.mxu0 0
        %1194 = vmatpush2.bf16.xpose.msra.mxu0 0
        %1195 = vmatprep.subr.bf16.mxu0 0
        %1196 = vmatpush2.bf16.xpose.msra.mxu0 0
        %1197 = vmatprep.subr.bf16.mxu0 0
        %1198 = vmatpush2.bf16.xpose.msra.mxu0 0
        %1199 = vmatprep.subr.bf16.mxu0 0
        %1200 = vmatpush2.bf16.xpose.msra.mxu0 0
        %1201 = vmatprep.subr.bf16.mxu0 0
        %1202 = vmatpush2.bf16.xpose.msra.mxu0 0
        %1203 = vmatprep.mubr.bf16.mxu0 0
        %1204 = vmatmul.mubr.bf16.gmra.mxu0 %v1166
        %v1205 = vpop.f32.mrf.mxu0
        %v1206 = vadd.f32 0.0, %v1205
        %v1207 = vpop.f32.mrf.mxu0
        %v1208 = vpop.f32.mrf.mxu0
        %v1209 = vpop.f32.mrf.mxu0
        %1210 = vdwg.mxu0
        %v1211 = vlaneseq
        %v1212 = vand.u32 %v1211, 127
        %vm1213 = vcmp.lt.s32.totalorder %v1212, 10
        %v1214 = vsel %vm1213, %v1053, -1e+30
        %v1215 = vsel %vm1213, %v1104, -1e+30
        %v1216 = vsel %vm1213, %v1155, -1e+30
        %v1217 = vsel %vm1213, %v1206, -1e+30
        %vm1218 = vcmask 130048
        %v1219 = vsel %vm1218, %v1214, -inf
        %1220 = vmax.xlane.f32.xlu0 %v1219
        %v1221 = vpop.xlane.xlu0 %1220
        %v1222 = vsel %vm1218, %v1215, -inf
        %1223 = vmax.xlane.f32.xlu0 %v1222
        %v1224 = vpop.xlane.xlu0 %1223
        %v1225 = vsel %vm1218, %v1216, -inf
        %1226 = vmax.xlane.f32.xlu0 %v1225
        %v1227 = vpop.xlane.xlu0 %1226
        %v1228 = vsel %vm1218, %v1217, -inf
        %1229 = vmax.xlane.f32.xlu0 %v1228
        %v1230 = vpop.xlane.xlu0 %1229
        %v1231 = vsub.f32 -inf, %v1221
        %v1232 = vsub.f32 -inf, %v1224
        %v1233 = vsub.f32 -inf, %v1227
        %v1234 = vsub.f32 -inf, %v1230
        %v1235 = vmul.f32 %v1231, 1.442695
        %v1236 = vpow.pop %v1235
        %v1237 = vmul.f32 %v1232, 1.442695
        %v1238 = vpow.pop %v1237
        %v1239 = vmul.f32 %v1233, 1.442695
        %v1240 = vpow.pop %v1239
        %v1241 = vmul.f32 %v1234, 1.442695
        %v1242 = vpow.pop %v1241
        %v1243 = vsub.f32 %v1214, %v1221
        %v1244 = vsub.f32 %v1215, %v1224
        %v1245 = vsub.f32 %v1216, %v1227
        %v1246 = vsub.f32 %v1217, %v1230
        %v1247 = vmul.f32 %v1243, 1.442695
        %v1248 = vpow.pop %v1247
        %v1249 = vmul.f32 %v1244, 1.442695
        %v1250 = vpow.pop %v1249
        %v1251 = vmul.f32 %v1245, 1.442695
        %v1252 = vpow.pop %v1251
        %v1253 = vmul.f32 %v1246, 1.442695
        %v1254 = vpow.pop %v1253
        %v1255 = vmul.f32 %v1236, 0.0
        %v1256 = vmul.f32 %v1238, 0.0
        %v1257 = vmul.f32 %v1240, 0.0
        %v1258 = vmul.f32 %v1242, 0.0
        %v1259 = vsel %vm1218, %v1248, 0.0
        %1260 = vadd.xlane.f32.xlu0 %v1259
        %v1261 = vpop.xlane.xlu0 %1260
        %v1262 = vsel %vm1218, %v1250, 0.0
        %1263 = vadd.xlane.f32.xlu0 %v1262
        %v1264 = vpop.xlane.xlu0 %1263
        %v1265 = vsel %vm1218, %v1252, 0.0
        %1266 = vadd.xlane.f32.xlu0 %v1265
        %v1267 = vpop.xlane.xlu0 %1266
        %v1268 = vsel %vm1218, %v1254, 0.0
        %1269 = vadd.xlane.f32.xlu0 %v1268
        %v1270 = vpop.xlane.xlu0 %1269
        %v1271 = vadd.f32 %v1255, %v1261
        %v1272 = vadd.f32 %v1256, %v1264
        %v1273 = vadd.f32 %v1257, %v1267
        %v1274 = vadd.f32 %v1258, %v1270
        %v1275 = vpack.c.bf16 %v1248, %v1248
        %v1276 = vpack.c.bf16 %v1250, %v1250
        %v1277 = vpack.c.bf16 %v1252, %v1252
        %v1278 = vpack.c.bf16 %v1254, %v1254
        %v1281 = vunpack.c.l.b16 %v998
        %v1282 = vunpack.c.l.b16 %v999
        %v1283 = vpack.c.b16 %v1282, %v1281
        %v1286 = vsel %vm1218, %v1275, 0
        %1288 = vmatprep.subr.bf16.mxu0 0
        %1289 = vmatpush1.bf16.msra.mxu0 0
        %1290 = vmatprep.subr.bf16.mxu0 0
        %1291 = vmatpush1.bf16.msra.mxu0 0
        %1292 = vmatprep.subr.bf16.mxu0 0
        %1293 = vmatpush1.bf16.msra.mxu0 0
        %1294 = vmatprep.subr.bf16.mxu0 0
        %1295 = vmatpush1.bf16.msra.mxu0 0
        %1296 = vmatprep.subr.bf16.mxu0 0
        %1297 = vmatpush1.bf16.msra.mxu0 0
        %1298 = vmatprep.subr.bf16.mxu0 0
        %1299 = vmatpush1.bf16.msra.mxu0 0
        %1300 = vmatprep.subr.bf16.mxu0 0
        %1301 = vmatpush1.bf16.msra.mxu0 0
        %1302 = vmatprep.subr.bf16.mxu0 0
        %1303 = vmatpush1.bf16.msra.mxu0 %v1283
        %1304 = vmatprep.subr.bf16.mxu0 0
        %1305 = vmatpush2.bf16.msra.mxu0 0
        %1306 = vmatprep.subr.bf16.mxu0 0
        %1307 = vmatpush2.bf16.msra.mxu0 0
        %1308 = vmatprep.subr.bf16.mxu0 0
        %1309 = vmatpush2.bf16.msra.mxu0 0
        %1310 = vmatprep.subr.bf16.mxu0 0
        %1311 = vmatpush2.bf16.msra.mxu0 0
        %1312 = vmatprep.subr.bf16.mxu0 0
        %1313 = vmatpush2.bf16.msra.mxu0 0
        %1314 = vmatprep.subr.bf16.mxu0 0
        %1315 = vmatpush2.bf16.msra.mxu0 0
        %1316 = vmatprep.subr.bf16.mxu0 0
        %1317 = vmatpush2.bf16.msra.mxu0 0
        %1318 = vmatprep.subr.bf16.mxu0 0
        %1319 = vmatpush2.bf16.msra.mxu0 0
        %1320 = vmatprep.mubr.bf16.mxu0 0
        %1321 = vmatmul.mubr.bf16.gmra.mxu0 %v1286
        %v1322 = vpop.f32.mrf.mxu0
        %v1323 = vadd.f32 0.0, %v1322
        %v1324 = vpop.f32.mrf.mxu0
        %v1325 = vpop.f32.mrf.mxu0
        %v1326 = vpop.f32.mrf.mxu0
        %1327 = vdwg.mxu0
        %v1330 = vunpack.c.l.b16 %v1000
        %v1331 = vunpack.c.l.b16 %v1001
        %v1332 = vpack.c.b16 %v1331, %v1330
        %v1335 = vsel %vm1218, %v1276, 0
        %1337 = vmatprep.subr.bf16.mxu0 0
        %1338 = vmatpush1.bf16.msra.mxu0 0
        %1339 = vmatprep.subr.bf16.mxu0 0
        %1340 = vmatpush1.bf16.msra.mxu0 0
        %1341 = vmatprep.subr.bf16.mxu0 0
        %1342 = vmatpush1.bf16.msra.mxu0 0
        %1343 = vmatprep.subr.bf16.mxu0 0
        %1344 = vmatpush1.bf16.msra.mxu0 0
        %1345 = vmatprep.subr.bf16.mxu0 0
        %1346 = vmatpush1.bf16.msra.mxu0 0
        %1347 = vmatprep.subr.bf16.mxu0 0
        %1348 = vmatpush1.bf16.msra.mxu0 0
        %1349 = vmatprep.subr.bf16.mxu0 0
        %1350 = vmatpush1.bf16.msra.mxu0 0
        %1351 = vmatprep.subr.bf16.mxu0 0
        %1352 = vmatpush1.bf16.msra.mxu0 %v1332
        %1353 = vmatprep.subr.bf16.mxu0 0
        %1354 = vmatpush2.bf16.msra.mxu0 0
        %1355 = vmatprep.subr.bf16.mxu0 0
        %1356 = vmatpush2.bf16.msra.mxu0 0
        %1357 = vmatprep.subr.bf16.mxu0 0
        %1358 = vmatpush2.bf16.msra.mxu0 0
        %1359 = vmatprep.subr.bf16.mxu0 0
        %1360 = vmatpush2.bf16.msra.mxu0 0
        %1361 = vmatprep.subr.bf16.mxu0 0
        %1362 = vmatpush2.bf16.msra.mxu0 0
        %1363 = vmatprep.subr.bf16.mxu0 0
        %1364 = vmatpush2.bf16.msra.mxu0 0
        %1365 = vmatprep.subr.bf16.mxu0 0
        %1366 = vmatpush2.bf16.msra.mxu0 0
        %1367 = vmatprep.subr.bf16.mxu0 0
        %1368 = vmatpush2.bf16.msra.mxu0 0
        %1369 = vmatprep.mubr.bf16.mxu0 0
        %1370 = vmatmul.mubr.bf16.gmra.mxu0 %v1335
        %v1371 = vpop.f32.mrf.mxu0
        %v1372 = vadd.f32 0.0, %v1371
        %v1373 = vpop.f32.mrf.mxu0
        %v1374 = vpop.f32.mrf.mxu0
        %v1375 = vpop.f32.mrf.mxu0
        %1376 = vdwg.mxu0
        %v1379 = vunpack.c.l.b16 %v1002
        %v1380 = vunpack.c.l.b16 %v1003
        %v1381 = vpack.c.b16 %v1380, %v1379
        %v1384 = vsel %vm1218, %v1277, 0
        %1386 = vmatprep.subr.bf16.mxu0 0
        %1387 = vmatpush1.bf16.msra.mxu0 0
        %1388 = vmatprep.subr.bf16.mxu0 0
        %1389 = vmatpush1.bf16.msra.mxu0 0
        %1390 = vmatprep.subr.bf16.mxu0 0
        %1391 = vmatpush1.bf16.msra.mxu0 0
        %1392 = vmatprep.subr.bf16.mxu0 0
        %1393 = vmatpush1.bf16.msra.mxu0 0
        %1394 = vmatprep.subr.bf16.mxu0 0
        %1395 = vmatpush1.bf16.msra.mxu0 0
        %1396 = vmatprep.subr.bf16.mxu0 0
        %1397 = vmatpush1.bf16.msra.mxu0 0
        %1398 = vmatprep.subr.bf16.mxu0 0
        %1399 = vmatpush1.bf16.msra.mxu0 0
        %1400 = vmatprep.subr.bf16.mxu0 0
        %1401 = vmatpush1.bf16.msra.mxu0 %v1381
        %1402 = vmatprep.subr.bf16.mxu0 0
        %1403 = vmatpush2.bf16.msra.mxu0 0
        %1404 = vmatprep.subr.bf16.mxu0 0
        %1405 = vmatpush2.bf16.msra.mxu0 0
        %1406 = vmatprep.subr.bf16.mxu0 0
        %1407 = vmatpush2.bf16.msra.mxu0 0
        %1408 = vmatprep.subr.bf16.mxu0 0
        %1409 = vmatpush2.bf16.msra.mxu0 0
        %1410 = vmatprep.subr.bf16.mxu0 0
        %1411 = vmatpush2.bf16.msra.mxu0 0
        %1412 = vmatprep.subr.bf16.mxu0 0
        %1413 = vmatpush2.bf16.msra.mxu0 0
        %1414 = vmatprep.subr.bf16.mxu0 0
        %1415 = vmatpush2.bf16.msra.mxu0 0
        %1416 = vmatprep.subr.bf16.mxu0 0
        %1417 = vmatpush2.bf16.msra.mxu0 0
        %1418 = vmatprep.mubr.bf16.mxu0 0
        %1419 = vmatmul.mubr.bf16.gmra.mxu0 %v1384
        %v1420 = vpop.f32.mrf.mxu0
        %v1421 = vadd.f32 0.0, %v1420
        %v1422 = vpop.f32.mrf.mxu0
        %v1423 = vpop.f32.mrf.mxu0
        %v1424 = vpop.f32.mrf.mxu0
        %1425 = vdwg.mxu0
        %v1428 = vunpack.c.l.b16 %v1004
        %v1429 = vunpack.c.l.b16 %v1005
        %v1430 = vpack.c.b16 %v1429, %v1428
        %v1433 = vsel %vm1218, %v1278, 0
        %1435 = vmatprep.subr.bf16.mxu0 0
        %1436 = vmatpush1.bf16.msra.mxu0 0
        %1437 = vmatprep.subr.bf16.mxu0 0
        %1438 = vmatpush1.bf16.msra.mxu0 0
        %1439 = vmatprep.subr.bf16.mxu0 0
        %1440 = vmatpush1.bf16.msra.mxu0 0
        %1441 = vmatprep.subr.bf16.mxu0 0
        %1442 = vmatpush1.bf16.msra.mxu0 0
        %1443 = vmatprep.subr.bf16.mxu0 0
        %1444 = vmatpush1.bf16.msra.mxu0 0
        %1445 = vmatprep.subr.bf16.mxu0 0
        %1446 = vmatpush1.bf16.msra.mxu0 0
        %1447 = vmatprep.subr.bf16.mxu0 0
        %1448 = vmatpush1.bf16.msra.mxu0 0
        %1449 = vmatprep.subr.bf16.mxu0 0
        %1450 = vmatpush1.bf16.msra.mxu0 %v1430
        %1451 = vmatprep.subr.bf16.mxu0 0
        %1452 = vmatpush2.bf16.msra.mxu0 0
        %1453 = vmatprep.subr.bf16.mxu0 0
        %1454 = vmatpush2.bf16.msra.mxu0 0
        %1455 = vmatprep.subr.bf16.mxu0 0
        %1456 = vmatpush2.bf16.msra.mxu0 0
        %1457 = vmatprep.subr.bf16.mxu0 0
        %1458 = vmatpush2.bf16.msra.mxu0 0
        %1459 = vmatprep.subr.bf16.mxu0 0
        %1460 = vmatpush2.bf16.msra.mxu0 0
        %1461 = vmatprep.subr.bf16.mxu0 0
        %1462 = vmatpush2.bf16.msra.mxu0 0
        %1463 = vmatprep.subr.bf16.mxu0 0
        %1464 = vmatpush2.bf16.msra.mxu0 0
        %1465 = vmatprep.subr.bf16.mxu0 0
        %1466 = vmatpush2.bf16.msra.mxu0 0
        %1467 = vmatprep.mubr.bf16.mxu0 0
        %1468 = vmatmul.mubr.bf16.gmra.mxu0 %v1433
        %v1469 = vpop.f32.mrf.mxu0
        %v1470 = vadd.f32 0.0, %v1469
        %v1471 = vpop.f32.mrf.mxu0
        %v1472 = vpop.f32.mrf.mxu0
        %v1473 = vpop.f32.mrf.mxu0
        %1474 = vdwg.mxu0
        %v1475 = vadd.f32 %v1255, %v1323
        %v1476 = vadd.f32 %v1256, %v1372
        %v1477 = vadd.f32 %v1257, %v1421
        %v1478 = vadd.f32 %v1258, %v1470
        %v1479 = vrcp.pop %v1271
        %v1480 = vrcp.pop %v1272
        %v1481 = vrcp.pop %v1273
        %v1482 = vrcp.pop %v1274
        %v1483 = vmul.f32 %v1475, %v1479
        %v1484 = vmul.f32 %v1476, %v1480
        %v1485 = vmul.f32 %v1477, %v1481
        %v1486 = vmul.f32 %v1478, %v1482
        %1488 = vrot.lane.b32.xlu0 %v1484, 8
        %v1489 = vpop.permute.xlu0 %1488
        %1492 = vrot.lane.b32.xlu0 %v1485, 16
        %v1493 = vpop.permute.xlu0 %1492
        %1496 = vrot.lane.b32.xlu0 %v1486, 24
        %v1497 = vpop.permute.xlu0 %1496
        %v1499 = vsel %vm1011, %v1483, %v1489
        %v1500 = vsel %vm1218, %v1499, %v1493
        %vm1501 = vcmask 195584
        %v1502 = vsel %vm1501, %v1500, %v1497
        %v1503 = vpack.c.bf16 %v1502, %v1502
        %v1504 = vld [vmem:[%s9] sm:$0xf]
        %v1505 = vld [vmem:[%s9 + $0x4] sm:$0xf]
        %v1506 = vld [vmem:[%s9 + $0x8] sm:$0xf]
        %v1507 = vld [vmem:[%s9 + $0xc] sm:$0xf]
        %v1508 = vld [vmem:[%s10] sm:$0x1]
        %v1510 = vlaneseq
        %v1511 = vshrl.u32 %v1510, 7
        %v1512 = vsub.s32 0, %v1511
        %v1513 = vrot.slane %v1508, %v1512
        %v1519 = vunpack.c.l.b16 %v1504
        %v1520 = vunpack.c.l.b16 %v1505
        %v1521 = vunpack.c.l.b16 %v1506
        %v1522 = vunpack.c.l.b16 %v1507
        %v1523 = vpack.c.b16 %v1520, %v1519
        %v1524 = vpack.c.b16 %v1522, %v1521
        %v1528 = vsel %vm931, %v1503, 0
        %1530 = vmatprep.subr.bf16.mxu0 0
        %1531 = vmatpush1.bf16.msra.mxu0 0
        %1532 = vmatprep.subr.bf16.mxu0 0
        %1533 = vmatpush1.bf16.msra.mxu0 0
        %1534 = vmatprep.subr.bf16.mxu0 0
        %1535 = vmatpush1.bf16.msra.mxu0 0
        %1536 = vmatprep.subr.bf16.mxu0 0
        %1537 = vmatpush1.bf16.msra.mxu0 0
        %1538 = vmatprep.subr.bf16.mxu0 0
        %1539 = vmatpush1.bf16.msra.mxu0 0
        %1540 = vmatprep.subr.bf16.mxu0 0
        %1541 = vmatpush1.bf16.msra.mxu0 0
        %1542 = vmatprep.subr.bf16.mxu0 0
        %1543 = vmatpush1.bf16.msra.mxu0 %v1524
        %1544 = vmatprep.subr.bf16.mxu0 0
        %1545 = vmatpush1.bf16.msra.mxu0 %v1523
        %1546 = vmatprep.subr.bf16.mxu0 0
        %1547 = vmatpush2.bf16.msra.mxu0 0
        %1548 = vmatprep.subr.bf16.mxu0 0
        %1549 = vmatpush2.bf16.msra.mxu0 0
        %1550 = vmatprep.subr.bf16.mxu0 0
        %1551 = vmatpush2.bf16.msra.mxu0 0
        %1552 = vmatprep.subr.bf16.mxu0 0
        %1553 = vmatpush2.bf16.msra.mxu0 0
        %1554 = vmatprep.subr.bf16.mxu0 0
        %1555 = vmatpush2.bf16.msra.mxu0 0
        %1556 = vmatprep.subr.bf16.mxu0 0
        %1557 = vmatpush2.bf16.msra.mxu0 0
        %1558 = vmatprep.subr.bf16.mxu0 0
        %1559 = vmatpush2.bf16.msra.mxu0 0
        %1560 = vmatprep.subr.bf16.mxu0 0
        %1561 = vmatpush2.bf16.msra.mxu0 0
        %1562 = vmatprep.mubr.bf16.mxu0 0
        %1563 = vmatmul.mubr.bf16.gmra.mxu0 %v1528
        %v1564 = vpop.f32.mrf.mxu0
        %v1565 = vadd.f32 %v1513, %v1564
        %v1566 = vpop.f32.mrf.mxu0
        %v1567 = vpop.f32.mrf.mxu0
        %v1568 = vpop.f32.mrf.mxu0
        %1569 = vdwg.mxu0
        %v1570 = vadd.f32 %v1565, %v906
        %v1571 = vld [vmem:[%s11] sm:$0x1]
        %v1572 = vld [vmem:[%s12] sm:$0x1]
        %v1573 = vsel %vm931, %v1570, 0.0
        %1574 = vadd.xlane.f32.xlu0 %v1573
        %v1575 = vpop.xlane.xlu0 %1574
        %v1576 = vrcp.pop 32.0
        %v1577 = vmul.f32 %v1575, %v1576
        %v1578 = vsub.f32 %v1570, %v1577
        %v1579 = vmul.f32 %v1578, %v1578
        %v1580 = vsel %vm931, %v1579, 0.0
        %1581 = vadd.xlane.f32.xlu0 %v1580
        %v1582 = vpop.xlane.xlu0 %1581
        %v1583 = vrcp.pop 31.0
        %v1584 = vmul.f32 %v1582, %v1583
        %v1585 = vrsqrt.pop %v1584
        %v1586 = vmul.f32 %v1584, %v1585
        %vm1587 = vcmp.eq.f32.partialorder %v1584, inf
        %v1588 = vsel %vm1587, %v1584, %v1586
        %vm1589 = vcmp.eq.f32.partialorder %v1584, 0.0
        %v1590 = vand.u32 %v1584, 2147483648
        %v1591 = vsel %vm1589, %v1590, %v1588
        %v1592 = vadd.f32 %v1591, 1e-06
        %v1593 = vrcp.pop %v1592
        %v1594 = vmul.f32 %v1578, %v1593
        %v1596 = vlaneseq
        %v1597 = vshrl.u32 %v1596, 7
        %v1598 = vsub.s32 0, %v1597
        %v1599 = vrot.slane %v1571, %v1598
        %v1601 = vmul.f32 %v1599, %v1594
        %v1603 = vlaneseq
        %v1604 = vshrl.u32 %v1603, 7
        %v1605 = vsub.s32 0, %v1604
        %v1606 = vrot.slane %v1572, %v1605
        %v1608 = vadd.f32 %v1601, %v1606
        %1609 = vst.msk [vmem:[%s630] sm:$0xff] %vm931, %v1608
        %s1610 = sand.u32 %s348, 1
        %s1611 = scalar_lea.sflag [#allocation6], %s1610
        %s1612 = sand.u32 %s348, 1
        %s1613 = smul.addr %s1612, 8
        %s1614 = scalar_lea.vmem [#allocation19], %s1613
        // Predicated region
        $region113: #{tpu_custom_call.1} parent=71 // pred_check
          %p1615 = pneg %p358
        $region114: #{tpu_custom_call.1} parent=71 // pred_check_branch
          %1617 = sbr.rel (%p1615) target = $region116
        $region115: #{tpu_custom_call.1} parent=71 // pred_region
          %s1619 = ssub.s32 128, 128
          %1620 = vsyncadd %s1611, %s1619
          %s1621 = sadd.s32 %s41, %s40
          %s1622 = smul.addr %s1621, 128
          %s1623 = scalar_lea.hbm %s13, %s1622
          %s1625 = sshll.u32 %s1614, 4
          %s1626 = int_to_ptr.vmem [resolvable:$true] %s1625
          %1628 = dma.vmem_to_hbm [thread:$0]  %s1626, 128, %s1623, %s1611
        $region116: #{tpu_custom_call.1} parent=71 // pred_fallthru
          _
      $region72: #{tpu_custom_call.1} parent=5 // pred_fallthru
        _
      %p1629 = scmp.le.s32.totalorder 2, %s31
      // Predicated region
      $region117: #{tpu_custom_call.1} parent=5 // pred_check
        %p1630 = pneg %p1629
      $region118: #{tpu_custom_call.1} parent=5 // pred_check_branch
        %1632 = sbr.rel (%p1630) target = $region120
      $region119: #{tpu_custom_call.1} parent=5 // pred_region
        %s1633 = ssub.s32 %s31, 2
        // Predicated region
        $region121: #{tpu_custom_call.1} parent=119 // pred_check
          %p1634 = pneg %p364
        $region122: #{tpu_custom_call.1} parent=119 // pred_check_branch
          %1636 = sbr.rel (%p1634) target = $region124
        $region123: #{tpu_custom_call.1} parent=119 // pred_region
          %s1637 = sand.u32 %s349, 1
          %s1638 = scalar_lea.sflag [#allocation6], %s1637
          %s1639 = sand.u32 %s349, 1
          %s1640 = smul.addr %s1639, 8
          %s1641 = scalar_lea.vmem [#allocation19], %s1640
          %1642 = dma.done %s1638, 128
        $region124: #{tpu_custom_call.1} parent=119 // pred_fallthru
          _
      $region120: #{tpu_custom_call.1} parent=5 // pred_fallthru
        _
    $region6: #{tpu_custom_call.1} parent=1 // loop_footer
      %s35 = sadd.s32 1, %s31
    $region7: #{tpu_custom_call.1} parent=1 // loop_footer_branch
      %30 = sbr.rel target = $region3
    $region8: #{tpu_custom_call.1} parent=1 // loop_exit
      _
    %1643 = vsyncpa [#allocation5], 1
    %s1644 = scalar_lea.sflag [#allocation5], 1
    %1645 = vsyncpa %s1644, 1
    %1646 = vsyncpa [#allocation8], 1
    %s1647 = scalar_lea.sflag [#allocation8], 1
    %1648 = vsyncpa %s1647, 1
    %1649 = vsyncpa [#allocation11], 1
    %1650 = vsyncpa [#allocation14], 1
    %1651 = vsyncpa [#allocation17], 1
    %1652 = vsyncpa [#allocation6], 1
    %s1653 = scalar_lea.sflag [#allocation6], 1
    %1654 = vsyncpa %s1653, 1

</llo_original>
